<compile_context>
chip_gen: v5e
topology: v5e:2x2
jax: 0.10.0
libtpu: 0.0.40
codegen_flags: <defaults>
</compile_context>

<pallas_src>
import functools

import jax
import jax.numpy as jnp
from jax.experimental import pallas as pl
from jax.experimental.pallas import tpu as pltpu


def _avgpool_construct_kernel(
    x_ref, gamma_ref, beta_ref,        # pipelined inputs (VMEM blocks)
    out_ref,                           # (B, L_total, D) concatenated output, raw HBM ref
    s0, s1, s2, s3,                    # VMEM staging, one slab per pyramid level
    sems,                              # DMA-completion semaphores, shape (4,)
    *, strides, level_rows, level_offsets, eps,
):
    tb, tl, d = x_ref.shape
    r0, r1, r2, r3 = level_rows

    gamma = gamma_ref[...].astype(jnp.float32)      # (1, D)
    beta = beta_ref[...].astype(jnp.float32)        # (1, D)

    def layernorm(v):                  # v: (rows, D) f32 ; PyTorch LayerNorm (biased var)
        mean = jnp.mean(v, axis=-1, keepdims=True)
        c = v - mean
        var = jnp.mean(c * c, axis=-1, keepdims=True)
        return c * jax.lax.rsqrt(var + eps) * gamma + beta

    def pool(src, rows_out, stride):
        # Mean over `stride` consecutive input rows == the nested AvgPool1d chain
        # (floor / tail-drop), done as `stride` sublane-strided loads + dense VPU adds.
        acc = src[pl.ds(0, rows_out, stride), :].astype(jnp.float32)
        for k in range(1, stride):
            acc = acc + src[pl.ds(k, rows_out, stride), :].astype(jnp.float32)
        return acc * (1.0 / float(stride))

    for j in range(tb):                # static unroll over the batch block
        xj_ref = x_ref.at[j]           # (TL, D) view of batch row j
        xj = xj_ref[...].astype(jnp.float32)
        s0[j] = layernorm(xj).astype(s0.dtype)
        s1[j] = layernorm(pool(xj_ref, r1, strides[0])).astype(s1.dtype)
        s2[j] = layernorm(pool(xj_ref, r2, strides[1])).astype(s2.dtype)
        s3[j] = layernorm(pool(xj_ref, r3, strides[2])).astype(s3.dtype)

    # Write each level straight into its row range of the concatenated output.  Waiting
    # inside the step keeps scratch reuse / kernel exit safe under megacore splitting;
    # HBM stays busy during the wait because the next tile's input DMA is already in
    # flight via the auto-pipeline.
    b0 = pl.program_id(0) * tb
    t = pl.program_id(1)
    copies = []
    for i, (stage, rows, base) in enumerate(
            zip((s0, s1, s2, s3), (r0, r1, r2, r3), level_offsets)):
        dst = out_ref.at[pl.ds(b0, tb), pl.ds(base + t * rows, rows), :]
        cp = pltpu.make_async_copy(stage, dst, sems.at[i])
        cp.start()
        copies.append(cp)
    for cp in copies:
        cp.wait()


def _normalize_windows(window_size):
    if isinstance(window_size, (list, tuple)):
        ws = tuple(int(w) for w in window_size)
        assert len(ws) == 3, "AvgPooling_Construct uses exactly three pooling layers"
    else:
        ws = (int(window_size),) * 3
    assert all(w >= 1 for w in ws)
    return ws


def _choose_blocking(B, L0, D, base, max_block_rows=None):
    """Pick (batch rows per step TB, L rows per step TL, number of L tiles)."""
    if max_block_rows is None:
        # Size the step by the f32 compute footprint (~1 MiB), independent of I/O dtype:
        # HBM-bound pipelined kernels reach ~85% of roofline by 0.5-2 MiB tiles, and a
        # small step keeps bf16 inputs from ballooning the in-kernel f32 temporaries.
        max_block_rows = max(8 * base, (1 << 20) // max(1, D * 4))
    if L0 % base == 0 and L0 > max_block_rows:
        # Long sequences: tile L.  Tiles must divide L0, keep all three pooling levels
        # tile-local (multiple of base) and keep pooled blocks sublane aligned (x8).
        align = 8 * base
        tl = (min(max_block_rows, L0) // align) * align
        while tl >= align and L0 % tl != 0:
            tl -= align
        if tl >= align:
            return 1, tl, L0 // tl
    # Short sequences (the common Pyraformer case): one L tile, block several batch rows
    # per step to amortize grid-step overhead, but keep >= 2 grid steps when possible so
    # both v7x TensorCores get work.
    tb_cap = max(1, max_block_rows // max(L0, 1))
    if B >= 2:
        tb_cap = min(tb_cap, B // 2)
    tb_cap = max(1, min(tb_cap, B))
    tb = max(d for d in range(1, tb_cap + 1) if B % d == 0)
    return tb, L0, 1


def avg_pooling_construct(x, gamma, beta, window_size, *, eps=1e-5, max_block_rows=None):
    """Pallas implementation of AvgPooling_Construct.forward.

    x: (B, L, d_model); gamma/beta: (d_model,) LayerNorm affine parameters.
    Returns the concatenated, normalized pyramid
      (B, L + L//w1 + L//(w1*w2) + L//(w1*w2*w3), d_model)
    produced directly by the kernel (no wrapper-side concatenation pass over HBM).
    """
    w1, w2, w3 = _normalize_windows(window_size)
    B, L0, D = x.shape
    L1 = L0 // w1
    L2 = L1 // w2
    L3 = L2 // w3
    assert L3 >= 1, "sequence too short for three pooling levels"
    L_total = L0 + L1 + L2 + L3
    base = w1 * w2 * w3

    TB, TL, n_tiles = _choose_blocking(B, L0, D, base, max_block_rows)
    n_bb = B // TB
    if n_tiles == 1:
        r1, r2, r3 = L1, L2, L3            # floor / tail-drop handled in-kernel
    else:
        r1 = TL // w1
        r2 = r1 // w2
        r3 = r2 // w3
    r0 = TL
    assert n_tiles * r1 == L1 and n_tiles * r2 == L2 and n_tiles * r3 == L3

    level_rows = (r0, r1, r2, r3)
    level_offsets = (0, L0, L0 + L1, L0 + L1 + L2)
    strides = (w1, w1 * w2, w1 * w2 * w3)

    gamma2 = gamma.reshape(1, D).astype(jnp.float32)
    beta2 = beta.reshape(1, D).astype(jnp.float32)

    kernel = functools.partial(
        _avgpool_construct_kernel,
        strides=strides, level_rows=level_rows, level_offsets=level_offsets,
        eps=float(eps),
    )

    # VMEM budget: double-buffered input block + output staging slabs + the f32
    # temporaries the kernel actually materializes (sized by D*4, independent of the
    # I/O dtype), capped well below the smallest physical VMEM (v7x: 64 MiB / TC).
    itemsize = jnp.dtype(x.dtype).itemsize
    in_block = TB * TL * D * itemsize
    stage_bytes = TB * (r0 + r1 + r2 + r3) * D * itemsize
    f32_tile = TB * TL * D * 4
    need = 2 * in_block + stage_bytes + 4 * f32_tile + (1 << 20)
    try:
        phys = pltpu.get_tpu_info().vmem_capacity_bytes
    except Exception:  # interpret mode / older runtimes
        phys = 64 * 1024 * 1024
    cap = min(48 * 1024 * 1024, (3 * phys) // 4)
    vmem_limit = int(min(cap, max(need, 16 * 1024 * 1024)))

    return pl.pallas_call(
        kernel,
        out_shape=jax.ShapeDtypeStruct((B, L_total, D), x.dtype),
        grid_spec=pltpu.PrefetchScalarGridSpec(
            num_scalar_prefetch=0,
            grid=(n_bb, n_tiles),
            in_specs=[
                pl.BlockSpec((TB, TL, D), lambda bb, t: (bb, t, 0)),
                pl.BlockSpec((1, D), lambda bb, t: (0, 0)),
                pl.BlockSpec((1, D), lambda bb, t: (0, 0)),
            ],
            out_specs=pl.BlockSpec(memory_space=pl.ANY),
            scratch_shapes=[
                pltpu.VMEM((TB, r0, D), x.dtype),
                pltpu.VMEM((TB, r1, D), x.dtype),
                pltpu.VMEM((TB, r2, D), x.dtype),
                pltpu.VMEM((TB, r3, D), x.dtype),
                pltpu.SemaphoreType.DMA((4,)),
            ],
        ),
        compiler_params=pltpu.CompilerParams(
            dimension_semantics=("parallel", "parallel"),
            vmem_limit_bytes=vmem_limit,
        ),
    )(x, gamma2, beta2)


def _reference(x, gamma, beta, windows, eps=1e-5):
    """Pure-JAX reference mirroring the PyTorch forward."""
    B, L, D = x.shape
    outs = [x]
    cur = x
    for w in windows:
        l_out = cur.shape[1] // w
        cur = cur[:, : l_out * w, :].reshape(B, l_out, w, D).mean(axis=2)
        outs.append(cur)
    full = jnp.concatenate(outs, axis=1)
    mean = full.mean(-1, keepdims=True)
    var = ((full - mean) ** 2).mean(-1, keepdims=True)
    return (full - mean) / jnp.sqrt(var + eps) * gamma + beta


if __name__ == "__main__":
    key = jax.random.PRNGKey(0)
    k_x, k_g, k_b, k_x2, k_x3 = jax.random.split(key, 5)

    d_model = 128
    gamma = 1.0 + 0.1 * jax.random.normal(k_g, (d_model,), dtype=jnp.float32)
    beta = 0.1 * jax.random.normal(k_b, (d_model,), dtype=jnp.float32)

    def check(x, windows_arg, *, tol=1e-4, **kw):
        out = jax.block_until_ready(
            avg_pooling_construct(x, gamma, beta, windows_arg, **kw))
        ws = _normalize_windows(windows_arg)
        ref = _reference(x.astype(jnp.float32), gamma, beta, ws)
        assert out.shape == ref.shape, (out.shape, ref.shape)
        err = jnp.max(jnp.abs(out.astype(jnp.float32) - ref))
        assert jnp.allclose(out.astype(jnp.float32), ref, atol=tol, rtol=tol), float(err)
        return out

    # 1) Module-default-like shapes: B=2, L=64, w=4 -> TB=1, grid (2, 1).
    x1 = jax.random.normal(k_x, (2, 64, d_model), dtype=jnp.float32)
    check(x1, 4)

    # 2) Batch-blocked path: B=8 -> TB=4, grid (2, 1) (both v7x TCs busy).
    x2 = jax.random.normal(k_x2, (8, 64, d_model), dtype=jnp.float32)
    check(x2, 4)

    # 3) Multi-L-tile path with a window-size list: grid (2, 4), dynamic row-offset DMAs.
    x3 = jax.random.normal(k_x3, (2, 256, d_model), dtype=jnp.float32)
    check(x3, [2, 2, 2], max_block_rows=64)

    # 4) Ragged length (AvgPool1d floor / tail-drop semantics): L=70, w=4 -> 70+17+4+1 rows.
    x4 = jax.random.normal(k_x, (2, 70, d_model), dtype=jnp.float32)
    check(x4, 4)

    # 5) bf16 I/O with f32 accumulation inside the kernel.
    xb = x1.astype(jnp.bfloat16)
    outb = check(xb, 4, tol=5e-2)
    assert outb.dtype == jnp.bfloat16

    print("KERNEL_OK")
</pallas_src>

<mosaic_0001>
module attributes {stable_mosaic.version = 11 : i64} {
  func.func @_avgpool_construct_kernel(%arg0: i32, %arg1: i32, %arg2: memref<1x64x128xf32, #tpu.memory_space<vmem>>, %arg3: memref<1x128xf32, #tpu.memory_space<vmem>>, %arg4: memref<1x128xf32, #tpu.memory_space<vmem>>, %arg5: memref<2x85x128xf32, #tpu.memory_space<any>>, %arg6: memref<1x64x128xf32, #tpu.memory_space<vmem>>, %arg7: memref<1x16x128xf32, #tpu.memory_space<vmem>>, %arg8: memref<1x4x128xf32, #tpu.memory_space<vmem>>, %arg9: memref<1x1x128xf32, #tpu.memory_space<vmem>>, %arg10: memref<4x!tpu.dma_semaphore, #tpu.memory_space<semaphore_mem>>) attributes {dimension_semantics = [#tpu.dimension_semantics<parallel>, #tpu.dimension_semantics<parallel>], iteration_bounds = array<i64: 2, 1>, scalar_prefetch = 0 : i64, scratch_operands = 5 : i64, tpu.core_type = #tpu.core_type<tc>, window_params = [{transform_indices = @transform_0, window_bounds = array<i64: 1, 64, 128>}, {pipeline_mode = #tpu.pipeline_mode<synchronous>, transform_indices = @transform_1, window_bounds = array<i64: 1, 128>}, {pipeline_mode = #tpu.pipeline_mode<synchronous>, transform_indices = @transform_2, window_bounds = array<i64: 1, 128>}, {}]} {
    %c0 = arith.constant 0 : index
    %c0_0 = arith.constant 0 : index
    %0 = vector.load %arg3[%c0, %c0_0] : memref<1x128xf32, #tpu.memory_space<vmem>>, vector<1x128xf32>
    %c0_1 = arith.constant 0 : index
    %c0_2 = arith.constant 0 : index
    %1 = vector.load %arg4[%c0_1, %c0_2] : memref<1x128xf32, #tpu.memory_space<vmem>>, vector<1x128xf32>
    %c0_3 = arith.constant 0 : index
    %c0_4 = arith.constant 0 : index
    %c0_5 = arith.constant 0 : index
    %2 = vector.load %arg2[%c0_3, %c0_4, %c0_5] : memref<1x64x128xf32, #tpu.memory_space<vmem>>, vector<1x64x128xf32>
    %3 = vector.shape_cast %2 : vector<1x64x128xf32> to vector<64x128xf32>
    %cst = arith.constant dense<0.000000e+00> : vector<64xf32>
    %4 = vector.multi_reduction <add>, %3, %cst [1] : vector<64x128xf32> to vector<64xf32>
    %5 = vector.shape_cast %4 : vector<64xf32> to vector<64x1xf32>
    %cst_6 = arith.constant 1.280000e+02 : f32
    %6 = vector.broadcast %cst_6 : f32 to vector<64x1xf32>
    %7 = arith.divf %5, %6 : vector<64x1xf32>
    %8 = vector.broadcast %7 : vector<64x1xf32> to vector<64x128xf32>
    %9 = arith.subf %3, %8 : vector<64x128xf32>
    %10 = arith.mulf %9, %9 : vector<64x128xf32>
    %cst_7 = arith.constant dense<0.000000e+00> : vector<64xf32>
    %11 = vector.multi_reduction <add>, %10, %cst_7 [1] : vector<64x128xf32> to vector<64xf32>
    %12 = vector.shape_cast %11 : vector<64xf32> to vector<64x1xf32>
    %cst_8 = arith.constant 1.280000e+02 : f32
    %13 = vector.broadcast %cst_8 : f32 to vector<64x1xf32>
    %14 = arith.divf %12, %13 : vector<64x1xf32>
    %cst_9 = arith.constant 9.99999974E-6 : f32
    %15 = vector.broadcast %cst_9 : f32 to vector<64x1xf32>
    %16 = arith.addf %14, %15 : vector<64x1xf32>
    %17 = math.rsqrt %16 : vector<64x1xf32>
    %18 = vector.broadcast %17 : vector<64x1xf32> to vector<64x128xf32>
    %19 = arith.mulf %9, %18 : vector<64x128xf32>
    %20 = vector.broadcast %0 : vector<1x128xf32> to vector<64x128xf32>
    %21 = arith.mulf %19, %20 : vector<64x128xf32>
    %22 = vector.broadcast %1 : vector<1x128xf32> to vector<64x128xf32>
    %23 = arith.addf %21, %22 : vector<64x128xf32>
    %c0_10 = arith.constant 0 : index
    %c0_11 = arith.constant 0 : index
    %c0_12 = arith.constant 0 : index
    %24 = vector.load %arg6[%c0_10, %c0_11, %c0_12] : memref<1x64x128xf32, #tpu.memory_space<vmem>>, vector<1x64x128xf32>
    %25 = vector.shape_cast %24 : vector<1x64x128xf32> to vector<64x128xf32>
    %26 = vector.shape_cast %23 : vector<64x128xf32> to vector<1x64x128xf32>
    tpu.vector_store %arg6[%c0_10, %c0_11, %c0_12], %26 {strides = array<i32>} : memref<1x64x128xf32, #tpu.memory_space<vmem>>, vector<1x64x128xf32>,
    %c0_i32 = arith.constant 0 : i32
    %c0_i32_13 = arith.constant 0 : i32
    %c0_i32_14 = arith.constant 0 : i32
    %27 = tpu.memref_slice %arg2[%c0_i32, %c0_i32_13, %c0_i32_14] : memref<1x64x128xf32, #tpu.memory_space<vmem>> -> memref<1x64x128xf32, #tpu.memory_space<vmem>>
    %28 = tpu.memref_squeeze %27 : memref<1x64x128xf32, #tpu.memory_space<vmem>> -> memref<64x128xf32, #tpu.memory_space<vmem>>
    %c0_15 = arith.constant 0 : index
    %c0_16 = arith.constant 0 : index
    %29 = tpu.strided_load %28[%c0_15, %c0_16] {strides = array<i32: 4, 1>} : memref<64x128xf32, #tpu.memory_space<vmem>>, vector<16x128xf32>
    %c0_i32_17 = arith.constant 0 : i32
    %c0_i32_18 = arith.constant 0 : i32
    %c0_i32_19 = arith.constant 0 : i32
    %30 = tpu.memref_slice %arg2[%c0_i32_17, %c0_i32_18, %c0_i32_19] : memref<1x64x128xf32, #tpu.memory_space<vmem>> -> memref<1x64x128xf32, #tpu.memory_space<vmem>>
    %31 = tpu.memref_squeeze %30 : memref<1x64x128xf32, #tpu.memory_space<vmem>> -> memref<64x128xf32, #tpu.memory_space<vmem>>
    %c1 = arith.constant 1 : index
    %c0_20 = arith.constant 0 : index
    %32 = tpu.strided_load %31[%c1, %c0_20] {strides = array<i32: 4, 1>} : memref<64x128xf32, #tpu.memory_space<vmem>>, vector<16x128xf32>
    %33 = arith.addf %29, %32 : vector<16x128xf32>
    %c0_i32_21 = arith.constant 0 : i32
    %c0_i32_22 = arith.constant 0 : i32
    %c0_i32_23 = arith.constant 0 : i32
    %34 = tpu.memref_slice %arg2[%c0_i32_21, %c0_i32_22, %c0_i32_23] : memref<1x64x128xf32, #tpu.memory_space<vmem>> -> memref<1x64x128xf32, #tpu.memory_space<vmem>>
    %35 = tpu.memref_squeeze %34 : memref<1x64x128xf32, #tpu.memory_space<vmem>> -> memref<64x128xf32, #tpu.memory_space<vmem>>
    %c2 = arith.constant 2 : index
    %c0_24 = arith.constant 0 : index
    %36 = tpu.strided_load %35[%c2, %c0_24] {strides = array<i32: 4, 1>} : memref<64x128xf32, #tpu.memory_space<vmem>>, vector<16x128xf32>
    %37 = arith.addf %33, %36 : vector<16x128xf32>
    %c0_i32_25 = arith.constant 0 : i32
    %c0_i32_26 = arith.constant 0 : i32
    %c0_i32_27 = arith.constant 0 : i32
    %38 = tpu.memref_slice %arg2[%c0_i32_25, %c0_i32_26, %c0_i32_27] : memref<1x64x128xf32, #tpu.memory_space<vmem>> -> memref<1x64x128xf32, #tpu.memory_space<vmem>>
    %39 = tpu.memref_squeeze %38 : memref<1x64x128xf32, #tpu.memory_space<vmem>> -> memref<64x128xf32, #tpu.memory_space<vmem>>
    %c3 = arith.constant 3 : index
    %c0_28 = arith.constant 0 : index
    %40 = tpu.strided_load %39[%c3, %c0_28] {strides = array<i32: 4, 1>} : memref<64x128xf32, #tpu.memory_space<vmem>>, vector<16x128xf32>
    %41 = arith.addf %37, %40 : vector<16x128xf32>
    %cst_29 = arith.constant 2.500000e-01 : f32
    %42 = vector.broadcast %cst_29 : f32 to vector<16x128xf32>
    %43 = arith.mulf %41, %42 : vector<16x128xf32>
    %cst_30 = arith.constant dense<0.000000e+00> : vector<16xf32>
    %44 = vector.multi_reduction <add>, %43, %cst_30 [1] : vector<16x128xf32> to vector<16xf32>
    %45 = vector.shape_cast %44 : vector<16xf32> to vector<16x1xf32>
    %cst_31 = arith.constant 1.280000e+02 : f32
    %46 = vector.broadcast %cst_31 : f32 to vector<16x1xf32>
    %47 = arith.divf %45, %46 : vector<16x1xf32>
    %48 = vector.broadcast %47 : vector<16x1xf32> to vector<16x128xf32>
    %49 = arith.subf %43, %48 : vector<16x128xf32>
    %50 = arith.mulf %49, %49 : vector<16x128xf32>
    %cst_32 = arith.constant dense<0.000000e+00> : vector<16xf32>
    %51 = vector.multi_reduction <add>, %50, %cst_32 [1] : vector<16x128xf32> to vector<16xf32>
    %52 = vector.shape_cast %51 : vector<16xf32> to vector<16x1xf32>
    %cst_33 = arith.constant 1.280000e+02 : f32
    %53 = vector.broadcast %cst_33 : f32 to vector<16x1xf32>
    %54 = arith.divf %52, %53 : vector<16x1xf32>
    %cst_34 = arith.constant 9.99999974E-6 : f32
    %55 = vector.broadcast %cst_34 : f32 to vector<16x1xf32>
    %56 = arith.addf %54, %55 : vector<16x1xf32>
    %57 = math.rsqrt %56 : vector<16x1xf32>
    %58 = vector.broadcast %57 : vector<16x1xf32> to vector<16x128xf32>
    %59 = arith.mulf %49, %58 : vector<16x128xf32>
    %60 = vector.broadcast %0 : vector<1x128xf32> to vector<16x128xf32>
    %61 = arith.mulf %59, %60 : vector<16x128xf32>
    %62 = vector.broadcast %1 : vector<1x128xf32> to vector<16x128xf32>
    %63 = arith.addf %61, %62 : vector<16x128xf32>
    %c0_35 = arith.constant 0 : index
    %c0_36 = arith.constant 0 : index
    %c0_37 = arith.constant 0 : index
    %64 = vector.load %arg7[%c0_35, %c0_36, %c0_37] : memref<1x16x128xf32, #tpu.memory_space<vmem>>, vector<1x16x128xf32>
    %65 = vector.shape_cast %64 : vector<1x16x128xf32> to vector<16x128xf32>
    %66 = vector.shape_cast %63 : vector<16x128xf32> to vector<1x16x128xf32>
    tpu.vector_store %arg7[%c0_35, %c0_36, %c0_37], %66 {strides = array<i32>} : memref<1x16x128xf32, #tpu.memory_space<vmem>>, vector<1x16x128xf32>,
    %c0_i32_38 = arith.constant 0 : i32
    %c0_i32_39 = arith.constant 0 : i32
    %c0_i32_40 = arith.constant 0 : i32
    %67 = tpu.memref_slice %arg2[%c0_i32_38, %c0_i32_39, %c0_i32_40] : memref<1x64x128xf32, #tpu.memory_space<vmem>> -> memref<1x64x128xf32, #tpu.memory_space<vmem>>
    %68 = tpu.memref_squeeze %67 : memref<1x64x128xf32, #tpu.memory_space<vmem>> -> memref<64x128xf32, #tpu.memory_space<vmem>>
    %c0_41 = arith.constant 0 : index
    %c0_42 = arith.constant 0 : index
    %69 = tpu.strided_load %68[%c0_41, %c0_42] {strides = array<i32: 16, 1>} : memref<64x128xf32, #tpu.memory_space<vmem>>, vector<4x128xf32>
    %c0_i32_43 = arith.constant 0 : i32
    %c0_i32_44 = arith.constant 0 : i32
    %c0_i32_45 = arith.constant 0 : i32
    %70 = tpu.memref_slice %arg2[%c0_i32_43, %c0_i32_44, %c0_i32_45] : memref<1x64x128xf32, #tpu.memory_space<vmem>> -> memref<1x64x128xf32, #tpu.memory_space<vmem>>
    %71 = tpu.memref_squeeze %70 : memref<1x64x128xf32, #tpu.memory_space<vmem>> -> memref<64x128xf32, #tpu.memory_space<vmem>>
    %c1_46 = arith.constant 1 : index
    %c0_47 = arith.constant 0 : index
    %72 = tpu.strided_load %71[%c1_46, %c0_47] {strides = array<i32: 16, 1>} : memref<64x128xf32, #tpu.memory_space<vmem>>, vector<4x128xf32>
    %73 = arith.addf %69, %72 : vector<4x128xf32>
    %c0_i32_48 = arith.constant 0 : i32
    %c0_i32_49 = arith.constant 0 : i32
    %c0_i32_50 = arith.constant 0 : i32
    %74 = tpu.memref_slice %arg2[%c0_i32_48, %c0_i32_49, %c0_i32_50] : memref<1x64x128xf32, #tpu.memory_space<vmem>> -> memref<1x64x128xf32, #tpu.memory_space<vmem>>
    %75 = tpu.memref_squeeze %74 : memref<1x64x128xf32, #tpu.memory_space<vmem>> -> memref<64x128xf32, #tpu.memory_space<vmem>>
    %c2_51 = arith.constant 2 : index
    %c0_52 = arith.constant 0 : index
    %76 = tpu.strided_load %75[%c2_51, %c0_52] {strides = array<i32: 16, 1>} : memref<64x128xf32, #tpu.memory_space<vmem>>, vector<4x128xf32>
    %77 = arith.addf %73, %76 : vector<4x128xf32>
    %c0_i32_53 = arith.constant 0 : i32
    %c0_i32_54 = arith.constant 0 : i32
    %c0_i32_55 = arith.constant 0 : i32
    %78 = tpu.memref_slice %arg2[%c0_i32_53, %c0_i32_54, %c0_i32_55] : memref<1x64x128xf32, #tpu.memory_space<vmem>> -> memref<1x64x128xf32, #tpu.memory_space<vmem>>
    %79 = tpu.memref_squeeze %78 : memref<1x64x128xf32, #tpu.memory_space<vmem>> -> memref<64x128xf32, #tpu.memory_space<vmem>>
    %c3_56 = arith.constant 3 : index
    %c0_57 = arith.constant 0 : index
    %80 = tpu.strided_load %79[%c3_56, %c0_57] {strides = array<i32: 16, 1>} : memref<64x128xf32, #tpu.memory_space<vmem>>, vector<4x128xf32>
    %81 = arith.addf %77, %80 : vector<4x128xf32>
    %c0_i32_58 = arith.constant 0 : i32
    %c0_i32_59 = arith.constant 0 : i32
    %c0_i32_60 = arith.constant 0 : i32
    %82 = tpu.memref_slice %arg2[%c0_i32_58, %c0_i32_59, %c0_i32_60] : memref<1x64x128xf32, #tpu.memory_space<vmem>> -> memref<1x64x128xf32, #tpu.memory_space<vmem>>
    %83 = tpu.memref_squeeze %82 : memref<1x64x128xf32, #tpu.memory_space<vmem>> -> memref<64x128xf32, #tpu.memory_space<vmem>>
    %c4 = arith.constant 4 : index
    %c0_61 = arith.constant 0 : index
    %84 = tpu.strided_load %83[%c4, %c0_61] {strides = array<i32: 16, 1>} : memref<64x128xf32, #tpu.memory_space<vmem>>, vector<4x128xf32>
    %85 = arith.addf %81, %84 : vector<4x128xf32>
    %c0_i32_62 = arith.constant 0 : i32
    %c0_i32_63 = arith.constant 0 : i32
    %c0_i32_64 = arith.constant 0 : i32
    %86 = tpu.memref_slice %arg2[%c0_i32_62, %c0_i32_63, %c0_i32_64] : memref<1x64x128xf32, #tpu.memory_space<vmem>> -> memref<1x64x128xf32, #tpu.memory_space<vmem>>
    %87 = tpu.memref_squeeze %86 : memref<1x64x128xf32, #tpu.memory_space<vmem>> -> memref<64x128xf32, #tpu.memory_space<vmem>>
    %c5 = arith.constant 5 : index
    %c0_65 = arith.constant 0 : index
    %88 = tpu.strided_load %87[%c5, %c0_65] {strides = array<i32: 16, 1>} : memref<64x128xf32, #tpu.memory_space<vmem>>, vector<4x128xf32>
    %89 = arith.addf %85, %88 : vector<4x128xf32>
    %c0_i32_66 = arith.constant 0 : i32
    %c0_i32_67 = arith.constant 0 : i32
    %c0_i32_68 = arith.constant 0 : i32
    %90 = tpu.memref_slice %arg2[%c0_i32_66, %c0_i32_67, %c0_i32_68] : memref<1x64x128xf32, #tpu.memory_space<vmem>> -> memref<1x64x128xf32, #tpu.memory_space<vmem>>
    %91 = tpu.memref_squeeze %90 : memref<1x64x128xf32, #tpu.memory_space<vmem>> -> memref<64x128xf32, #tpu.memory_space<vmem>>
    %c6 = arith.constant 6 : index
    %c0_69 = arith.constant 0 : index
    %92 = tpu.strided_load %91[%c6, %c0_69] {strides = array<i32: 16, 1>} : memref<64x128xf32, #tpu.memory_space<vmem>>, vector<4x128xf32>
    %93 = arith.addf %89, %92 : vector<4x128xf32>
    %c0_i32_70 = arith.constant 0 : i32
    %c0_i32_71 = arith.constant 0 : i32
    %c0_i32_72 = arith.constant 0 : i32
    %94 = tpu.memref_slice %arg2[%c0_i32_70, %c0_i32_71, %c0_i32_72] : memref<1x64x128xf32, #tpu.memory_space<vmem>> -> memref<1x64x128xf32, #tpu.memory_space<vmem>>
    %95 = tpu.memref_squeeze %94 : memref<1x64x128xf32, #tpu.memory_space<vmem>> -> memref<64x128xf32, #tpu.memory_space<vmem>>
    %c7 = arith.constant 7 : index
    %c0_73 = arith.constant 0 : index
    %96 = tpu.strided_load %95[%c7, %c0_73] {strides = array<i32: 16, 1>} : memref<64x128xf32, #tpu.memory_space<vmem>>, vector<4x128xf32>
    %97 = arith.addf %93, %96 : vector<4x128xf32>
    %c0_i32_74 = arith.constant 0 : i32
    %c0_i32_75 = arith.constant 0 : i32
    %c0_i32_76 = arith.constant 0 : i32
    %98 = tpu.memref_slice %arg2[%c0_i32_74, %c0_i32_75, %c0_i32_76] : memref<1x64x128xf32, #tpu.memory_space<vmem>> -> memref<1x64x128xf32, #tpu.memory_space<vmem>>
    %99 = tpu.memref_squeeze %98 : memref<1x64x128xf32, #tpu.memory_space<vmem>> -> memref<64x128xf32, #tpu.memory_space<vmem>>
    %c8 = arith.constant 8 : index
    %c0_77 = arith.constant 0 : index
    %100 = tpu.strided_load %99[%c8, %c0_77] {strides = array<i32: 16, 1>} : memref<64x128xf32, #tpu.memory_space<vmem>>, vector<4x128xf32>
    %101 = arith.addf %97, %100 : vector<4x128xf32>
    %c0_i32_78 = arith.constant 0 : i32
    %c0_i32_79 = arith.constant 0 : i32
    %c0_i32_80 = arith.constant 0 : i32
    %102 = tpu.memref_slice %arg2[%c0_i32_78, %c0_i32_79, %c0_i32_80] : memref<1x64x128xf32, #tpu.memory_space<vmem>> -> memref<1x64x128xf32, #tpu.memory_space<vmem>>
    %103 = tpu.memref_squeeze %102 : memref<1x64x128xf32, #tpu.memory_space<vmem>> -> memref<64x128xf32, #tpu.memory_space<vmem>>
    %c9 = arith.constant 9 : index
    %c0_81 = arith.constant 0 : index
    %104 = tpu.strided_load %103[%c9, %c0_81] {strides = array<i32: 16, 1>} : memref<64x128xf32, #tpu.memory_space<vmem>>, vector<4x128xf32>
    %105 = arith.addf %101, %104 : vector<4x128xf32>
    %c0_i32_82 = arith.constant 0 : i32
    %c0_i32_83 = arith.constant 0 : i32
    %c0_i32_84 = arith.constant 0 : i32
    %106 = tpu.memref_slice %arg2[%c0_i32_82, %c0_i32_83, %c0_i32_84] : memref<1x64x128xf32, #tpu.memory_space<vmem>> -> memref<1x64x128xf32, #tpu.memory_space<vmem>>
    %107 = tpu.memref_squeeze %106 : memref<1x64x128xf32, #tpu.memory_space<vmem>> -> memref<64x128xf32, #tpu.memory_space<vmem>>
    %c10 = arith.constant 10 : index
    %c0_85 = arith.constant 0 : index
    %108 = tpu.strided_load %107[%c10, %c0_85] {strides = array<i32: 16, 1>} : memref<64x128xf32, #tpu.memory_space<vmem>>, vector<4x128xf32>
    %109 = arith.addf %105, %108 : vector<4x128xf32>
    %c0_i32_86 = arith.constant 0 : i32
    %c0_i32_87 = arith.constant 0 : i32
    %c0_i32_88 = arith.constant 0 : i32
    %110 = tpu.memref_slice %arg2[%c0_i32_86, %c0_i32_87, %c0_i32_88] : memref<1x64x128xf32, #tpu.memory_space<vmem>> -> memref<1x64x128xf32, #tpu.memory_space<vmem>>
    %111 = tpu.memref_squeeze %110 : memref<1x64x128xf32, #tpu.memory_space<vmem>> -> memref<64x128xf32, #tpu.memory_space<vmem>>
    %c11 = arith.constant 11 : index
    %c0_89 = arith.constant 0 : index
    %112 = tpu.strided_load %111[%c11, %c0_89] {strides = array<i32: 16, 1>} : memref<64x128xf32, #tpu.memory_space<vmem>>, vector<4x128xf32>
    %113 = arith.addf %109, %112 : vector<4x128xf32>
    %c0_i32_90 = arith.constant 0 : i32
    %c0_i32_91 = arith.constant 0 : i32
    %c0_i32_92 = arith.constant 0 : i32
    %114 = tpu.memref_slice %arg2[%c0_i32_90, %c0_i32_91, %c0_i32_92] : memref<1x64x128xf32, #tpu.memory_space<vmem>> -> memref<1x64x128xf32, #tpu.memory_space<vmem>>
    %115 = tpu.memref_squeeze %114 : memref<1x64x128xf32, #tpu.memory_space<vmem>> -> memref<64x128xf32, #tpu.memory_space<vmem>>
    %c12 = arith.constant 12 : index
    %c0_93 = arith.constant 0 : index
    %116 = tpu.strided_load %115[%c12, %c0_93] {strides = array<i32: 16, 1>} : memref<64x128xf32, #tpu.memory_space<vmem>>, vector<4x128xf32>
    %117 = arith.addf %113, %116 : vector<4x128xf32>
    %c0_i32_94 = arith.constant 0 : i32
    %c0_i32_95 = arith.constant 0 : i32
    %c0_i32_96 = arith.constant 0 : i32
    %118 = tpu.memref_slice %arg2[%c0_i32_94, %c0_i32_95, %c0_i32_96] : memref<1x64x128xf32, #tpu.memory_space<vmem>> -> memref<1x64x128xf32, #tpu.memory_space<vmem>>
    %119 = tpu.memref_squeeze %118 : memref<1x64x128xf32, #tpu.memory_space<vmem>> -> memref<64x128xf32, #tpu.memory_space<vmem>>
    %c13 = arith.constant 13 : index
    %c0_97 = arith.constant 0 : index
    %120 = tpu.strided_load %119[%c13, %c0_97] {strides = array<i32: 16, 1>} : memref<64x128xf32, #tpu.memory_space<vmem>>, vector<4x128xf32>
    %121 = arith.addf %117, %120 : vector<4x128xf32>
    %c0_i32_98 = arith.constant 0 : i32
    %c0_i32_99 = arith.constant 0 : i32
    %c0_i32_100 = arith.constant 0 : i32
    %122 = tpu.memref_slice %arg2[%c0_i32_98, %c0_i32_99, %c0_i32_100] : memref<1x64x128xf32, #tpu.memory_space<vmem>> -> memref<1x64x128xf32, #tpu.memory_space<vmem>>
    %123 = tpu.memref_squeeze %122 : memref<1x64x128xf32, #tpu.memory_space<vmem>> -> memref<64x128xf32, #tpu.memory_space<vmem>>
    %c14 = arith.constant 14 : index
    %c0_101 = arith.constant 0 : index
    %124 = tpu.strided_load %123[%c14, %c0_101] {strides = array<i32: 16, 1>} : memref<64x128xf32, #tpu.memory_space<vmem>>, vector<4x128xf32>
    %125 = arith.addf %121, %124 : vector<4x128xf32>
    %c0_i32_102 = arith.constant 0 : i32
    %c0_i32_103 = arith.constant 0 : i32
    %c0_i32_104 = arith.constant 0 : i32
    %126 = tpu.memref_slice %arg2[%c0_i32_102, %c0_i32_103, %c0_i32_104] : memref<1x64x128xf32, #tpu.memory_space<vmem>> -> memref<1x64x128xf32, #tpu.memory_space<vmem>>
    %127 = tpu.memref_squeeze %126 : memref<1x64x128xf32, #tpu.memory_space<vmem>> -> memref<64x128xf32, #tpu.memory_space<vmem>>
    %c15 = arith.constant 15 : index
    %c0_105 = arith.constant 0 : index
    %128 = tpu.strided_load %127[%c15, %c0_105] {strides = array<i32: 16, 1>} : memref<64x128xf32, #tpu.memory_space<vmem>>, vector<4x128xf32>
    %129 = arith.addf %125, %128 : vector<4x128xf32>
    %cst_106 = arith.constant 6.250000e-02 : f32
    %130 = vector.broadcast %cst_106 : f32 to vector<4x128xf32>
    %131 = arith.mulf %129, %130 : vector<4x128xf32>
    %cst_107 = arith.constant dense<0.000000e+00> : vector<4xf32>
    %132 = vector.multi_reduction <add>, %131, %cst_107 [1] : vector<4x128xf32> to vector<4xf32>
    %133 = vector.shape_cast %132 : vector<4xf32> to vector<4x1xf32>
    %cst_108 = arith.constant 1.280000e+02 : f32
    %134 = vector.broadcast %cst_108 : f32 to vector<4x1xf32>
    %135 = arith.divf %133, %134 : vector<4x1xf32>
    %136 = vector.broadcast %135 : vector<4x1xf32> to vector<4x128xf32>
    %137 = arith.subf %131, %136 : vector<4x128xf32>
    %138 = arith.mulf %137, %137 : vector<4x128xf32>
    %cst_109 = arith.constant dense<0.000000e+00> : vector<4xf32>
    %139 = vector.multi_reduction <add>, %138, %cst_109 [1] : vector<4x128xf32> to vector<4xf32>
    %140 = vector.shape_cast %139 : vector<4xf32> to vector<4x1xf32>
    %cst_110 = arith.constant 1.280000e+02 : f32
    %141 = vector.broadcast %cst_110 : f32 to vector<4x1xf32>
    %142 = arith.divf %140, %141 : vector<4x1xf32>
    %cst_111 = arith.constant 9.99999974E-6 : f32
    %143 = vector.broadcast %cst_111 : f32 to vector<4x1xf32>
    %144 = arith.addf %142, %143 : vector<4x1xf32>
    %145 = math.rsqrt %144 : vector<4x1xf32>
    %146 = vector.broadcast %145 : vector<4x1xf32> to vector<4x128xf32>
    %147 = arith.mulf %137, %146 : vector<4x128xf32>
    %148 = vector.broadcast %0 : vector<1x128xf32> to vector<4x128xf32>
    %149 = arith.mulf %147, %148 : vector<4x128xf32>
    %150 = vector.broadcast %1 : vector<1x128xf32> to vector<4x128xf32>
    %151 = arith.addf %149, %150 : vector<4x128xf32>
    %c0_112 = arith.constant 0 : index
    %c0_113 = arith.constant 0 : index
    %c0_114 = arith.constant 0 : index
    %152 = vector.load %arg8[%c0_112, %c0_113, %c0_114] : memref<1x4x128xf32, #tpu.memory_space<vmem>>, vector<1x4x128xf32>
    %153 = vector.shape_cast %152 : vector<1x4x128xf32> to vector<4x128xf32>
    %154 = vector.shape_cast %151 : vector<4x128xf32> to vector<1x4x128xf32>
    tpu.vector_store %arg8[%c0_112, %c0_113, %c0_114], %154 {strides = array<i32>} : memref<1x4x128xf32, #tpu.memory_space<vmem>>, vector<1x4x128xf32>,
    %c0_i32_115 = arith.constant 0 : i32
    %c0_i32_116 = arith.constant 0 : i32
    %c0_i32_117 = arith.constant 0 : i32
    %155 = tpu.memref_slice %arg2[%c0_i32_115, %c0_i32_116, %c0_i32_117] : memref<1x64x128xf32, #tpu.memory_space<vmem>> -> memref<1x64x128xf32, #tpu.memory_space<vmem>>
    %156 = tpu.memref_squeeze %155 : memref<1x64x128xf32, #tpu.memory_space<vmem>> -> memref<64x128xf32, #tpu.memory_space<vmem>>
    %c0_118 = arith.constant 0 : index
    %c0_119 = arith.constant 0 : index
    %157 = tpu.strided_load %156[%c0_118, %c0_119] {strides = array<i32: 64, 1>} : memref<64x128xf32, #tpu.memory_space<vmem>>, vector<1x128xf32>
    %c0_i32_120 = arith.constant 0 : i32
    %c0_i32_121 = arith.constant 0 : i32
    %c0_i32_122 = arith.constant 0 : i32
    %158 = tpu.memref_slice %arg2[%c0_i32_120, %c0_i32_121, %c0_i32_122] : memref<1x64x128xf32, #tpu.memory_space<vmem>> -> memref<1x64x128xf32, #tpu.memory_space<vmem>>
    %159 = tpu.memref_squeeze %158 : memref<1x64x128xf32, #tpu.memory_space<vmem>> -> memref<64x128xf32, #tpu.memory_space<vmem>>
    %c1_123 = arith.constant 1 : index
    %c0_124 = arith.constant 0 : index
    %160 = tpu.strided_load %159[%c1_123, %c0_124] {strides = array<i32: 64, 1>} : memref<64x128xf32, #tpu.memory_space<vmem>>, vector<1x128xf32>
    %161 = arith.addf %157, %160 : vector<1x128xf32>
    %c0_i32_125 = arith.constant 0 : i32
    %c0_i32_126 = arith.constant 0 : i32
    %c0_i32_127 = arith.constant 0 : i32
    %162 = tpu.memref_slice %arg2[%c0_i32_125, %c0_i32_126, %c0_i32_127] : memref<1x64x128xf32, #tpu.memory_space<vmem>> -> memref<1x64x128xf32, #tpu.memory_space<vmem>>
    %163 = tpu.memref_squeeze %162 : memref<1x64x128xf32, #tpu.memory_space<vmem>> -> memref<64x128xf32, #tpu.memory_space<vmem>>
    %c2_128 = arith.constant 2 : index
    %c0_129 = arith.constant 0 : index
    %164 = tpu.strided_load %163[%c2_128, %c0_129] {strides = array<i32: 64, 1>} : memref<64x128xf32, #tpu.memory_space<vmem>>, vector<1x128xf32>
    %165 = arith.addf %161, %164 : vector<1x128xf32>
    %c0_i32_130 = arith.constant 0 : i32
    %c0_i32_131 = arith.constant 0 : i32
    %c0_i32_132 = arith.constant 0 : i32
    %166 = tpu.memref_slice %arg2[%c0_i32_130, %c0_i32_131, %c0_i32_132] : memref<1x64x128xf32, #tpu.memory_space<vmem>> -> memref<1x64x128xf32, #tpu.memory_space<vmem>>
    %167 = tpu.memref_squeeze %166 : memref<1x64x128xf32, #tpu.memory_space<vmem>> -> memref<64x128xf32, #tpu.memory_space<vmem>>
    %c3_133 = arith.constant 3 : index
    %c0_134 = arith.constant 0 : index
    %168 = tpu.strided_load %167[%c3_133, %c0_134] {strides = array<i32: 64, 1>} : memref<64x128xf32, #tpu.memory_space<vmem>>, vector<1x128xf32>
    %169 = arith.addf %165, %168 : vector<1x128xf32>
    %c0_i32_135 = arith.constant 0 : i32
    %c0_i32_136 = arith.constant 0 : i32
    %c0_i32_137 = arith.constant 0 : i32
    %170 = tpu.memref_slice %arg2[%c0_i32_135, %c0_i32_136, %c0_i32_137] : memref<1x64x128xf32, #tpu.memory_space<vmem>> -> memref<1x64x128xf32, #tpu.memory_space<vmem>>
    %171 = tpu.memref_squeeze %170 : memref<1x64x128xf32, #tpu.memory_space<vmem>> -> memref<64x128xf32, #tpu.memory_space<vmem>>
    %c4_138 = arith.constant 4 : index
    %c0_139 = arith.constant 0 : index
    %172 = tpu.strided_load %171[%c4_138, %c0_139] {strides = array<i32: 64, 1>} : memref<64x128xf32, #tpu.memory_space<vmem>>, vector<1x128xf32>
    %173 = arith.addf %169, %172 : vector<1x128xf32>
    %c0_i32_140 = arith.constant 0 : i32
    %c0_i32_141 = arith.constant 0 : i32
    %c0_i32_142 = arith.constant 0 : i32
    %174 = tpu.memref_slice %arg2[%c0_i32_140, %c0_i32_141, %c0_i32_142] : memref<1x64x128xf32, #tpu.memory_space<vmem>> -> memref<1x64x128xf32, #tpu.memory_space<vmem>>
    %175 = tpu.memref_squeeze %174 : memref<1x64x128xf32, #tpu.memory_space<vmem>> -> memref<64x128xf32, #tpu.memory_space<vmem>>
    %c5_143 = arith.constant 5 : index
    %c0_144 = arith.constant 0 : index
    %176 = tpu.strided_load %175[%c5_143, %c0_144] {strides = array<i32: 64, 1>} : memref<64x128xf32, #tpu.memory_space<vmem>>, vector<1x128xf32>
    %177 = arith.addf %173, %176 : vector<1x128xf32>
    %c0_i32_145 = arith.constant 0 : i32
    %c0_i32_146 = arith.constant 0 : i32
    %c0_i32_147 = arith.constant 0 : i32
    %178 = tpu.memref_slice %arg2[%c0_i32_145, %c0_i32_146, %c0_i32_147] : memref<1x64x128xf32, #tpu.memory_space<vmem>> -> memref<1x64x128xf32, #tpu.memory_space<vmem>>
    %179 = tpu.memref_squeeze %178 : memref<1x64x128xf32, #tpu.memory_space<vmem>> -> memref<64x128xf32, #tpu.memory_space<vmem>>
    %c6_148 = arith.constant 6 : index
    %c0_149 = arith.constant 0 : index
    %180 = tpu.strided_load %179[%c6_148, %c0_149] {strides = array<i32: 64, 1>} : memref<64x128xf32, #tpu.memory_space<vmem>>, vector<1x128xf32>
    %181 = arith.addf %177, %180 : vector<1x128xf32>
    %c0_i32_150 = arith.constant 0 : i32
    %c0_i32_151 = arith.constant 0 : i32
    %c0_i32_152 = arith.constant 0 : i32
    %182 = tpu.memref_slice %arg2[%c0_i32_150, %c0_i32_151, %c0_i32_152] : memref<1x64x128xf32, #tpu.memory_space<vmem>> -> memref<1x64x128xf32, #tpu.memory_space<vmem>>
    %183 = tpu.memref_squeeze %182 : memref<1x64x128xf32, #tpu.memory_space<vmem>> -> memref<64x128xf32, #tpu.memory_space<vmem>>
    %c7_153 = arith.constant 7 : index
    %c0_154 = arith.constant 0 : index
    %184 = tpu.strided_load %183[%c7_153, %c0_154] {strides = array<i32: 64, 1>} : memref<64x128xf32, #tpu.memory_space<vmem>>, vector<1x128xf32>
    %185 = arith.addf %181, %184 : vector<1x128xf32>
    %c0_i32_155 = arith.constant 0 : i32
    %c0_i32_156 = arith.constant 0 : i32
    %c0_i32_157 = arith.constant 0 : i32
    %186 = tpu.memref_slice %arg2[%c0_i32_155, %c0_i32_156, %c0_i32_157] : memref<1x64x128xf32, #tpu.memory_space<vmem>> -> memref<1x64x128xf32, #tpu.memory_space<vmem>>
    %187 = tpu.memref_squeeze %186 : memref<1x64x128xf32, #tpu.memory_space<vmem>> -> memref<64x128xf32, #tpu.memory_space<vmem>>
    %c8_158 = arith.constant 8 : index
    %c0_159 = arith.constant 0 : index
    %188 = tpu.strided_load %187[%c8_158, %c0_159] {strides = array<i32: 64, 1>} : memref<64x128xf32, #tpu.memory_space<vmem>>, vector<1x128xf32>
    %189 = arith.addf %185, %188 : vector<1x128xf32>
    %c0_i32_160 = arith.constant 0 : i32
    %c0_i32_161 = arith.constant 0 : i32
    %c0_i32_162 = arith.constant 0 : i32
    %190 = tpu.memref_slice %arg2[%c0_i32_160, %c0_i32_161, %c0_i32_162] : memref<1x64x128xf32, #tpu.memory_space<vmem>> -> memref<1x64x128xf32, #tpu.memory_space<vmem>>
    %191 = tpu.memref_squeeze %190 : memref<1x64x128xf32, #tpu.memory_space<vmem>> -> memref<64x128xf32, #tpu.memory_space<vmem>>
    %c9_163 = arith.constant 9 : index
    %c0_164 = arith.constant 0 : index
    %192 = tpu.strided_load %191[%c9_163, %c0_164] {strides = array<i32: 64, 1>} : memref<64x128xf32, #tpu.memory_space<vmem>>, vector<1x128xf32>
    %193 = arith.addf %189, %192 : vector<1x128xf32>
    %c0_i32_165 = arith.constant 0 : i32
    %c0_i32_166 = arith.constant 0 : i32
    %c0_i32_167 = arith.constant 0 : i32
    %194 = tpu.memref_slice %arg2[%c0_i32_165, %c0_i32_166, %c0_i32_167] : memref<1x64x128xf32, #tpu.memory_space<vmem>> -> memref<1x64x128xf32, #tpu.memory_space<vmem>>
    %195 = tpu.memref_squeeze %194 : memref<1x64x128xf32, #tpu.memory_space<vmem>> -> memref<64x128xf32, #tpu.memory_space<vmem>>
    %c10_168 = arith.constant 10 : index
    %c0_169 = arith.constant 0 : index
    %196 = tpu.strided_load %195[%c10_168, %c0_169] {strides = array<i32: 64, 1>} : memref<64x128xf32, #tpu.memory_space<vmem>>, vector<1x128xf32>
    %197 = arith.addf %193, %196 : vector<1x128xf32>
    %c0_i32_170 = arith.constant 0 : i32
    %c0_i32_171 = arith.constant 0 : i32
    %c0_i32_172 = arith.constant 0 : i32
    %198 = tpu.memref_slice %arg2[%c0_i32_170, %c0_i32_171, %c0_i32_172] : memref<1x64x128xf32, #tpu.memory_space<vmem>> -> memref<1x64x128xf32, #tpu.memory_space<vmem>>
    %199 = tpu.memref_squeeze %198 : memref<1x64x128xf32, #tpu.memory_space<vmem>> -> memref<64x128xf32, #tpu.memory_space<vmem>>
    %c11_173 = arith.constant 11 : index
    %c0_174 = arith.constant 0 : index
    %200 = tpu.strided_load %199[%c11_173, %c0_174] {strides = array<i32: 64, 1>} : memref<64x128xf32, #tpu.memory_space<vmem>>, vector<1x128xf32>
    %201 = arith.addf %197, %200 : vector<1x128xf32>
    %c0_i32_175 = arith.constant 0 : i32
    %c0_i32_176 = arith.constant 0 : i32
    %c0_i32_177 = arith.constant 0 : i32
    %202 = tpu.memref_slice %arg2[%c0_i32_175, %c0_i32_176, %c0_i32_177] : memref<1x64x128xf32, #tpu.memory_space<vmem>> -> memref<1x64x128xf32, #tpu.memory_space<vmem>>
    %203 = tpu.memref_squeeze %202 : memref<1x64x128xf32, #tpu.memory_space<vmem>> -> memref<64x128xf32, #tpu.memory_space<vmem>>
    %c12_178 = arith.constant 12 : index
    %c0_179 = arith.constant 0 : index
    %204 = tpu.strided_load %203[%c12_178, %c0_179] {strides = array<i32: 64, 1>} : memref<64x128xf32, #tpu.memory_space<vmem>>, vector<1x128xf32>
    %205 = arith.addf %201, %204 : vector<1x128xf32>
    %c0_i32_180 = arith.constant 0 : i32
    %c0_i32_181 = arith.constant 0 : i32
    %c0_i32_182 = arith.constant 0 : i32
    %206 = tpu.memref_slice %arg2[%c0_i32_180, %c0_i32_181, %c0_i32_182] : memref<1x64x128xf32, #tpu.memory_space<vmem>> -> memref<1x64x128xf32, #tpu.memory_space<vmem>>
    %207 = tpu.memref_squeeze %206 : memref<1x64x128xf32, #tpu.memory_space<vmem>> -> memref<64x128xf32, #tpu.memory_space<vmem>>
    %c13_183 = arith.constant 13 : index
    %c0_184 = arith.constant 0 : index
    %208 = tpu.strided_load %207[%c13_183, %c0_184] {strides = array<i32: 64, 1>} : memref<64x128xf32, #tpu.memory_space<vmem>>, vector<1x128xf32>
    %209 = arith.addf %205, %208 : vector<1x128xf32>
    %c0_i32_185 = arith.constant 0 : i32
    %c0_i32_186 = arith.constant 0 : i32
    %c0_i32_187 = arith.constant 0 : i32
    %210 = tpu.memref_slice %arg2[%c0_i32_185, %c0_i32_186, %c0_i32_187] : memref<1x64x128xf32, #tpu.memory_space<vmem>> -> memref<1x64x128xf32, #tpu.memory_space<vmem>>
    %211 = tpu.memref_squeeze %210 : memref<1x64x128xf32, #tpu.memory_space<vmem>> -> memref<64x128xf32, #tpu.memory_space<vmem>>
    %c14_188 = arith.constant 14 : index
    %c0_189 = arith.constant 0 : index
    %212 = tpu.strided_load %211[%c14_188, %c0_189] {strides = array<i32: 64, 1>} : memref<64x128xf32, #tpu.memory_space<vmem>>, vector<1x128xf32>
    %213 = arith.addf %209, %212 : vector<1x128xf32>
    %c0_i32_190 = arith.constant 0 : i32
    %c0_i32_191 = arith.constant 0 : i32
    %c0_i32_192 = arith.constant 0 : i32
    %214 = tpu.memref_slice %arg2[%c0_i32_190, %c0_i32_191, %c0_i32_192] : memref<1x64x128xf32, #tpu.memory_space<vmem>> -> memref<1x64x128xf32, #tpu.memory_space<vmem>>
    %215 = tpu.memref_squeeze %214 : memref<1x64x128xf32, #tpu.memory_space<vmem>> -> memref<64x128xf32, #tpu.memory_space<vmem>>
    %c15_193 = arith.constant 15 : index
    %c0_194 = arith.constant 0 : index
    %216 = tpu.strided_load %215[%c15_193, %c0_194] {strides = array<i32: 64, 1>} : memref<64x128xf32, #tpu.memory_space<vmem>>, vector<1x128xf32>
    %217 = arith.addf %213, %216 : vector<1x128xf32>
    %c0_i32_195 = arith.constant 0 : i32
    %c0_i32_196 = arith.constant 0 : i32
    %c0_i32_197 = arith.constant 0 : i32
    %218 = tpu.memref_slice %arg2[%c0_i32_195, %c0_i32_196, %c0_i32_197] : memref<1x64x128xf32, #tpu.memory_space<vmem>> -> memref<1x64x128xf32, #tpu.memory_space<vmem>>
    %219 = tpu.memref_squeeze %218 : memref<1x64x128xf32, #tpu.memory_space<vmem>> -> memref<64x128xf32, #tpu.memory_space<vmem>>
    %c16 = arith.constant 16 : index
    %c0_198 = arith.constant 0 : index
    %220 = tpu.strided_load %219[%c16, %c0_198] {strides = array<i32: 64, 1>} : memref<64x128xf32, #tpu.memory_space<vmem>>, vector<1x128xf32>
    %221 = arith.addf %217, %220 : vector<1x128xf32>
    %c0_i32_199 = arith.constant 0 : i32
    %c0_i32_200 = arith.constant 0 : i32
    %c0_i32_201 = arith.constant 0 : i32
    %222 = tpu.memref_slice %arg2[%c0_i32_199, %c0_i32_200, %c0_i32_201] : memref<1x64x128xf32, #tpu.memory_space<vmem>> -> memref<1x64x128xf32, #tpu.memory_space<vmem>>
    %223 = tpu.memref_squeeze %222 : memref<1x64x128xf32, #tpu.memory_space<vmem>> -> memref<64x128xf32, #tpu.memory_space<vmem>>
    %c17 = arith.constant 17 : index
    %c0_202 = arith.constant 0 : index
    %224 = tpu.strided_load %223[%c17, %c0_202] {strides = array<i32: 64, 1>} : memref<64x128xf32, #tpu.memory_space<vmem>>, vector<1x128xf32>
    %225 = arith.addf %221, %224 : vector<1x128xf32>
    %c0_i32_203 = arith.constant 0 : i32
    %c0_i32_204 = arith.constant 0 : i32
    %c0_i32_205 = arith.constant 0 : i32
    %226 = tpu.memref_slice %arg2[%c0_i32_203, %c0_i32_204, %c0_i32_205] : memref<1x64x128xf32, #tpu.memory_space<vmem>> -> memref<1x64x128xf32, #tpu.memory_space<vmem>>
    %227 = tpu.memref_squeeze %226 : memref<1x64x128xf32, #tpu.memory_space<vmem>> -> memref<64x128xf32, #tpu.memory_space<vmem>>
    %c18 = arith.constant 18 : index
    %c0_206 = arith.constant 0 : index
    %228 = tpu.strided_load %227[%c18, %c0_206] {strides = array<i32: 64, 1>} : memref<64x128xf32, #tpu.memory_space<vmem>>, vector<1x128xf32>
    %229 = arith.addf %225, %228 : vector<1x128xf32>
    %c0_i32_207 = arith.constant 0 : i32
    %c0_i32_208 = arith.constant 0 : i32
    %c0_i32_209 = arith.constant 0 : i32
    %230 = tpu.memref_slice %arg2[%c0_i32_207, %c0_i32_208, %c0_i32_209] : memref<1x64x128xf32, #tpu.memory_space<vmem>> -> memref<1x64x128xf32, #tpu.memory_space<vmem>>
    %231 = tpu.memref_squeeze %230 : memref<1x64x128xf32, #tpu.memory_space<vmem>> -> memref<64x128xf32, #tpu.memory_space<vmem>>
    %c19 = arith.constant 19 : index
    %c0_210 = arith.constant 0 : index
    %232 = tpu.strided_load %231[%c19, %c0_210] {strides = array<i32: 64, 1>} : memref<64x128xf32, #tpu.memory_space<vmem>>, vector<1x128xf32>
    %233 = arith.addf %229, %232 : vector<1x128xf32>
    %c0_i32_211 = arith.constant 0 : i32
    %c0_i32_212 = arith.constant 0 : i32
    %c0_i32_213 = arith.constant 0 : i32
    %234 = tpu.memref_slice %arg2[%c0_i32_211, %c0_i32_212, %c0_i32_213] : memref<1x64x128xf32, #tpu.memory_space<vmem>> -> memref<1x64x128xf32, #tpu.memory_space<vmem>>
    %235 = tpu.memref_squeeze %234 : memref<1x64x128xf32, #tpu.memory_space<vmem>> -> memref<64x128xf32, #tpu.memory_space<vmem>>
    %c20 = arith.constant 20 : index
    %c0_214 = arith.constant 0 : index
    %236 = tpu.strided_load %235[%c20, %c0_214] {strides = array<i32: 64, 1>} : memref<64x128xf32, #tpu.memory_space<vmem>>, vector<1x128xf32>
    %237 = arith.addf %233, %236 : vector<1x128xf32>
    %c0_i32_215 = arith.constant 0 : i32
    %c0_i32_216 = arith.constant 0 : i32
    %c0_i32_217 = arith.constant 0 : i32
    %238 = tpu.memref_slice %arg2[%c0_i32_215, %c0_i32_216, %c0_i32_217] : memref<1x64x128xf32, #tpu.memory_space<vmem>> -> memref<1x64x128xf32, #tpu.memory_space<vmem>>
    %239 = tpu.memref_squeeze %238 : memref<1x64x128xf32, #tpu.memory_space<vmem>> -> memref<64x128xf32, #tpu.memory_space<vmem>>
    %c21 = arith.constant 21 : index
    %c0_218 = arith.constant 0 : index
    %240 = tpu.strided_load %239[%c21, %c0_218] {strides = array<i32: 64, 1>} : memref<64x128xf32, #tpu.memory_space<vmem>>, vector<1x128xf32>
    %241 = arith.addf %237, %240 : vector<1x128xf32>
    %c0_i32_219 = arith.constant 0 : i32
    %c0_i32_220 = arith.constant 0 : i32
    %c0_i32_221 = arith.constant 0 : i32
    %242 = tpu.memref_slice %arg2[%c0_i32_219, %c0_i32_220, %c0_i32_221] : memref<1x64x128xf32, #tpu.memory_space<vmem>> -> memref<1x64x128xf32, #tpu.memory_space<vmem>>
    %243 = tpu.memref_squeeze %242 : memref<1x64x128xf32, #tpu.memory_space<vmem>> -> memref<64x128xf32, #tpu.memory_space<vmem>>
    %c22 = arith.constant 22 : index
    %c0_222 = arith.constant 0 : index
    %244 = tpu.strided_load %243[%c22, %c0_222] {strides = array<i32: 64, 1>} : memref<64x128xf32, #tpu.memory_space<vmem>>, vector<1x128xf32>
    %245 = arith.addf %241, %244 : vector<1x128xf32>
    %c0_i32_223 = arith.constant 0 : i32
    %c0_i32_224 = arith.constant 0 : i32
    %c0_i32_225 = arith.constant 0 : i32
    %246 = tpu.memref_slice %arg2[%c0_i32_223, %c0_i32_224, %c0_i32_225] : memref<1x64x128xf32, #tpu.memory_space<vmem>> -> memref<1x64x128xf32, #tpu.memory_space<vmem>>
    %247 = tpu.memref_squeeze %246 : memref<1x64x128xf32, #tpu.memory_space<vmem>> -> memref<64x128xf32, #tpu.memory_space<vmem>>
    %c23 = arith.constant 23 : index
    %c0_226 = arith.constant 0 : index
    %248 = tpu.strided_load %247[%c23, %c0_226] {strides = array<i32: 64, 1>} : memref<64x128xf32, #tpu.memory_space<vmem>>, vector<1x128xf32>
    %249 = arith.addf %245, %248 : vector<1x128xf32>
    %c0_i32_227 = arith.constant 0 : i32
    %c0_i32_228 = arith.constant 0 : i32
    %c0_i32_229 = arith.constant 0 : i32
    %250 = tpu.memref_slice %arg2[%c0_i32_227, %c0_i32_228, %c0_i32_229] : memref<1x64x128xf32, #tpu.memory_space<vmem>> -> memref<1x64x128xf32, #tpu.memory_space<vmem>>
    %251 = tpu.memref_squeeze %250 : memref<1x64x128xf32, #tpu.memory_space<vmem>> -> memref<64x128xf32, #tpu.memory_space<vmem>>
    %c24 = arith.constant 24 : index
    %c0_230 = arith.constant 0 : index
    %252 = tpu.strided_load %251[%c24, %c0_230] {strides = array<i32: 64, 1>} : memref<64x128xf32, #tpu.memory_space<vmem>>, vector<1x128xf32>
    %253 = arith.addf %249, %252 : vector<1x128xf32>
    %c0_i32_231 = arith.constant 0 : i32
    %c0_i32_232 = arith.constant 0 : i32
    %c0_i32_233 = arith.constant 0 : i32
    %254 = tpu.memref_slice %arg2[%c0_i32_231, %c0_i32_232, %c0_i32_233] : memref<1x64x128xf32, #tpu.memory_space<vmem>> -> memref<1x64x128xf32, #tpu.memory_space<vmem>>
    %255 = tpu.memref_squeeze %254 : memref<1x64x128xf32, #tpu.memory_space<vmem>> -> memref<64x128xf32, #tpu.memory_space<vmem>>
    %c25 = arith.constant 25 : index
    %c0_234 = arith.constant 0 : index
    %256 = tpu.strided_load %255[%c25, %c0_234] {strides = array<i32: 64, 1>} : memref<64x128xf32, #tpu.memory_space<vmem>>, vector<1x128xf32>
    %257 = arith.addf %253, %256 : vector<1x128xf32>
    %c0_i32_235 = arith.constant 0 : i32
    %c0_i32_236 = arith.constant 0 : i32
    %c0_i32_237 = arith.constant 0 : i32
    %258 = tpu.memref_slice %arg2[%c0_i32_235, %c0_i32_236, %c0_i32_237] : memref<1x64x128xf32, #tpu.memory_space<vmem>> -> memref<1x64x128xf32, #tpu.memory_space<vmem>>
    %259 = tpu.memref_squeeze %258 : memref<1x64x128xf32, #tpu.memory_space<vmem>> -> memref<64x128xf32, #tpu.memory_space<vmem>>
    %c26 = arith.constant 26 : index
    %c0_238 = arith.constant 0 : index
    %260 = tpu.strided_load %259[%c26, %c0_238] {strides = array<i32: 64, 1>} : memref<64x128xf32, #tpu.memory_space<vmem>>, vector<1x128xf32>
    %261 = arith.addf %257, %260 : vector<1x128xf32>
    %c0_i32_239 = arith.constant 0 : i32
    %c0_i32_240 = arith.constant 0 : i32
    %c0_i32_241 = arith.constant 0 : i32
    %262 = tpu.memref_slice %arg2[%c0_i32_239, %c0_i32_240, %c0_i32_241] : memref<1x64x128xf32, #tpu.memory_space<vmem>> -> memref<1x64x128xf32, #tpu.memory_space<vmem>>
    %263 = tpu.memref_squeeze %262 : memref<1x64x128xf32, #tpu.memory_space<vmem>> -> memref<64x128xf32, #tpu.memory_space<vmem>>
    %c27 = arith.constant 27 : index
    %c0_242 = arith.constant 0 : index
    %264 = tpu.strided_load %263[%c27, %c0_242] {strides = array<i32: 64, 1>} : memref<64x128xf32, #tpu.memory_space<vmem>>, vector<1x128xf32>
    %265 = arith.addf %261, %264 : vector<1x128xf32>
    %c0_i32_243 = arith.constant 0 : i32
    %c0_i32_244 = arith.constant 0 : i32
    %c0_i32_245 = arith.constant 0 : i32
    %266 = tpu.memref_slice %arg2[%c0_i32_243, %c0_i32_244, %c0_i32_245] : memref<1x64x128xf32, #tpu.memory_space<vmem>> -> memref<1x64x128xf32, #tpu.memory_space<vmem>>
    %267 = tpu.memref_squeeze %266 : memref<1x64x128xf32, #tpu.memory_space<vmem>> -> memref<64x128xf32, #tpu.memory_space<vmem>>
    %c28 = arith.constant 28 : index
    %c0_246 = arith.constant 0 : index
    %268 = tpu.strided_load %267[%c28, %c0_246] {strides = array<i32: 64, 1>} : memref<64x128xf32, #tpu.memory_space<vmem>>, vector<1x128xf32>
    %269 = arith.addf %265, %268 : vector<1x128xf32>
    %c0_i32_247 = arith.constant 0 : i32
    %c0_i32_248 = arith.constant 0 : i32
    %c0_i32_249 = arith.constant 0 : i32
    %270 = tpu.memref_slice %arg2[%c0_i32_247, %c0_i32_248, %c0_i32_249] : memref<1x64x128xf32, #tpu.memory_space<vmem>> -> memref<1x64x128xf32, #tpu.memory_space<vmem>>
    %271 = tpu.memref_squeeze %270 : memref<1x64x128xf32, #tpu.memory_space<vmem>> -> memref<64x128xf32, #tpu.memory_space<vmem>>
    %c29 = arith.constant 29 : index
    %c0_250 = arith.constant 0 : index
    %272 = tpu.strided_load %271[%c29, %c0_250] {strides = array<i32: 64, 1>} : memref<64x128xf32, #tpu.memory_space<vmem>>, vector<1x128xf32>
    %273 = arith.addf %269, %272 : vector<1x128xf32>
    %c0_i32_251 = arith.constant 0 : i32
    %c0_i32_252 = arith.constant 0 : i32
    %c0_i32_253 = arith.constant 0 : i32
    %274 = tpu.memref_slice %arg2[%c0_i32_251, %c0_i32_252, %c0_i32_253] : memref<1x64x128xf32, #tpu.memory_space<vmem>> -> memref<1x64x128xf32, #tpu.memory_space<vmem>>
    %275 = tpu.memref_squeeze %274 : memref<1x64x128xf32, #tpu.memory_space<vmem>> -> memref<64x128xf32, #tpu.memory_space<vmem>>
    %c30 = arith.constant 30 : index
    %c0_254 = arith.constant 0 : index
    %276 = tpu.strided_load %275[%c30, %c0_254] {strides = array<i32: 64, 1>} : memref<64x128xf32, #tpu.memory_space<vmem>>, vector<1x128xf32>
    %277 = arith.addf %273, %276 : vector<1x128xf32>
    %c0_i32_255 = arith.constant 0 : i32
    %c0_i32_256 = arith.constant 0 : i32
    %c0_i32_257 = arith.constant 0 : i32
    %278 = tpu.memref_slice %arg2[%c0_i32_255, %c0_i32_256, %c0_i32_257] : memref<1x64x128xf32, #tpu.memory_space<vmem>> -> memref<1x64x128xf32, #tpu.memory_space<vmem>>
    %279 = tpu.memref_squeeze %278 : memref<1x64x128xf32, #tpu.memory_space<vmem>> -> memref<64x128xf32, #tpu.memory_space<vmem>>
    %c31 = arith.constant 31 : index
    %c0_258 = arith.constant 0 : index
    %280 = tpu.strided_load %279[%c31, %c0_258] {strides = array<i32: 64, 1>} : memref<64x128xf32, #tpu.memory_space<vmem>>, vector<1x128xf32>
    %281 = arith.addf %277, %280 : vector<1x128xf32>
    %c0_i32_259 = arith.constant 0 : i32
    %c0_i32_260 = arith.constant 0 : i32
    %c0_i32_261 = arith.constant 0 : i32
    %282 = tpu.memref_slice %arg2[%c0_i32_259, %c0_i32_260, %c0_i32_261] : memref<1x64x128xf32, #tpu.memory_space<vmem>> -> memref<1x64x128xf32, #tpu.memory_space<vmem>>
    %283 = tpu.memref_squeeze %282 : memref<1x64x128xf32, #tpu.memory_space<vmem>> -> memref<64x128xf32, #tpu.memory_space<vmem>>
    %c32 = arith.constant 32 : index
    %c0_262 = arith.constant 0 : index
    %284 = tpu.strided_load %283[%c32, %c0_262] {strides = array<i32: 64, 1>} : memref<64x128xf32, #tpu.memory_space<vmem>>, vector<1x128xf32>
    %285 = arith.addf %281, %284 : vector<1x128xf32>
    %c0_i32_263 = arith.constant 0 : i32
    %c0_i32_264 = arith.constant 0 : i32
    %c0_i32_265 = arith.constant 0 : i32
    %286 = tpu.memref_slice %arg2[%c0_i32_263, %c0_i32_264, %c0_i32_265] : memref<1x64x128xf32, #tpu.memory_space<vmem>> -> memref<1x64x128xf32, #tpu.memory_space<vmem>>
    %287 = tpu.memref_squeeze %286 : memref<1x64x128xf32, #tpu.memory_space<vmem>> -> memref<64x128xf32, #tpu.memory_space<vmem>>
    %c33 = arith.constant 33 : index
    %c0_266 = arith.constant 0 : index
    %288 = tpu.strided_load %287[%c33, %c0_266] {strides = array<i32: 64, 1>} : memref<64x128xf32, #tpu.memory_space<vmem>>, vector<1x128xf32>
    %289 = arith.addf %285, %288 : vector<1x128xf32>
    %c0_i32_267 = arith.constant 0 : i32
    %c0_i32_268 = arith.constant 0 : i32
    %c0_i32_269 = arith.constant 0 : i32
    %290 = tpu.memref_slice %arg2[%c0_i32_267, %c0_i32_268, %c0_i32_269] : memref<1x64x128xf32, #tpu.memory_space<vmem>> -> memref<1x64x128xf32, #tpu.memory_space<vmem>>
    %291 = tpu.memref_squeeze %290 : memref<1x64x128xf32, #tpu.memory_space<vmem>> -> memref<64x128xf32, #tpu.memory_space<vmem>>
    %c34 = arith.constant 34 : index
    %c0_270 = arith.constant 0 : index
    %292 = tpu.strided_load %291[%c34, %c0_270] {strides = array<i32: 64, 1>} : memref<64x128xf32, #tpu.memory_space<vmem>>, vector<1x128xf32>
    %293 = arith.addf %289, %292 : vector<1x128xf32>
    %c0_i32_271 = arith.constant 0 : i32
    %c0_i32_272 = arith.constant 0 : i32
    %c0_i32_273 = arith.constant 0 : i32
    %294 = tpu.memref_slice %arg2[%c0_i32_271, %c0_i32_272, %c0_i32_273] : memref<1x64x128xf32, #tpu.memory_space<vmem>> -> memref<1x64x128xf32, #tpu.memory_space<vmem>>
    %295 = tpu.memref_squeeze %294 : memref<1x64x128xf32, #tpu.memory_space<vmem>> -> memref<64x128xf32, #tpu.memory_space<vmem>>
    %c35 = arith.constant 35 : index
    %c0_274 = arith.constant 0 : index
    %296 = tpu.strided_load %295[%c35, %c0_274] {strides = array<i32: 64, 1>} : memref<64x128xf32, #tpu.memory_space<vmem>>, vector<1x128xf32>
    %297 = arith.addf %293, %296 : vector<1x128xf32>
    %c0_i32_275 = arith.constant 0 : i32
    %c0_i32_276 = arith.constant 0 : i32
    %c0_i32_277 = arith.constant 0 : i32
    %298 = tpu.memref_slice %arg2[%c0_i32_275, %c0_i32_276, %c0_i32_277] : memref<1x64x128xf32, #tpu.memory_space<vmem>> -> memref<1x64x128xf32, #tpu.memory_space<vmem>>
    %299 = tpu.memref_squeeze %298 : memref<1x64x128xf32, #tpu.memory_space<vmem>> -> memref<64x128xf32, #tpu.memory_space<vmem>>
    %c36 = arith.constant 36 : index
    %c0_278 = arith.constant 0 : index
    %300 = tpu.strided_load %299[%c36, %c0_278] {strides = array<i32: 64, 1>} : memref<64x128xf32, #tpu.memory_space<vmem>>, vector<1x128xf32>
    %301 = arith.addf %297, %300 : vector<1x128xf32>
    %c0_i32_279 = arith.constant 0 : i32
    %c0_i32_280 = arith.constant 0 : i32
    %c0_i32_281 = arith.constant 0 : i32
    %302 = tpu.memref_slice %arg2[%c0_i32_279, %c0_i32_280, %c0_i32_281] : memref<1x64x128xf32, #tpu.memory_space<vmem>> -> memref<1x64x128xf32, #tpu.memory_space<vmem>>
    %303 = tpu.memref_squeeze %302 : memref<1x64x128xf32, #tpu.memory_space<vmem>> -> memref<64x128xf32, #tpu.memory_space<vmem>>
    %c37 = arith.constant 37 : index
    %c0_282 = arith.constant 0 : index
    %304 = tpu.strided_load %303[%c37, %c0_282] {strides = array<i32: 64, 1>} : memref<64x128xf32, #tpu.memory_space<vmem>>, vector<1x128xf32>
    %305 = arith.addf %301, %304 : vector<1x128xf32>
    %c0_i32_283 = arith.constant 0 : i32
    %c0_i32_284 = arith.constant 0 : i32
    %c0_i32_285 = arith.constant 0 : i32
    %306 = tpu.memref_slice %arg2[%c0_i32_283, %c0_i32_284, %c0_i32_285] : memref<1x64x128xf32, #tpu.memory_space<vmem>> -> memref<1x64x128xf32, #tpu.memory_space<vmem>>
    %307 = tpu.memref_squeeze %306 : memref<1x64x128xf32, #tpu.memory_space<vmem>> -> memref<64x128xf32, #tpu.memory_space<vmem>>
    %c38 = arith.constant 38 : index
    %c0_286 = arith.constant 0 : index
    %308 = tpu.strided_load %307[%c38, %c0_286] {strides = array<i32: 64, 1>} : memref<64x128xf32, #tpu.memory_space<vmem>>, vector<1x128xf32>
    %309 = arith.addf %305, %308 : vector<1x128xf32>
    %c0_i32_287 = arith.constant 0 : i32
    %c0_i32_288 = arith.constant 0 : i32
    %c0_i32_289 = arith.constant 0 : i32
    %310 = tpu.memref_slice %arg2[%c0_i32_287, %c0_i32_288, %c0_i32_289] : memref<1x64x128xf32, #tpu.memory_space<vmem>> -> memref<1x64x128xf32, #tpu.memory_space<vmem>>
    %311 = tpu.memref_squeeze %310 : memref<1x64x128xf32, #tpu.memory_space<vmem>> -> memref<64x128xf32, #tpu.memory_space<vmem>>
    %c39 = arith.constant 39 : index
    %c0_290 = arith.constant 0 : index
    %312 = tpu.strided_load %311[%c39, %c0_290] {strides = array<i32: 64, 1>} : memref<64x128xf32, #tpu.memory_space<vmem>>, vector<1x128xf32>
    %313 = arith.addf %309, %312 : vector<1x128xf32>
    %c0_i32_291 = arith.constant 0 : i32
    %c0_i32_292 = arith.constant 0 : i32
    %c0_i32_293 = arith.constant 0 : i32
    %314 = tpu.memref_slice %arg2[%c0_i32_291, %c0_i32_292, %c0_i32_293] : memref<1x64x128xf32, #tpu.memory_space<vmem>> -> memref<1x64x128xf32, #tpu.memory_space<vmem>>
    %315 = tpu.memref_squeeze %314 : memref<1x64x128xf32, #tpu.memory_space<vmem>> -> memref<64x128xf32, #tpu.memory_space<vmem>>
    %c40 = arith.constant 40 : index
    %c0_294 = arith.constant 0 : index
    %316 = tpu.strided_load %315[%c40, %c0_294] {strides = array<i32: 64, 1>} : memref<64x128xf32, #tpu.memory_space<vmem>>, vector<1x128xf32>
    %317 = arith.addf %313, %316 : vector<1x128xf32>
    %c0_i32_295 = arith.constant 0 : i32
    %c0_i32_296 = arith.constant 0 : i32
    %c0_i32_297 = arith.constant 0 : i32
    %318 = tpu.memref_slice %arg2[%c0_i32_295, %c0_i32_296, %c0_i32_297] : memref<1x64x128xf32, #tpu.memory_space<vmem>> -> memref<1x64x128xf32, #tpu.memory_space<vmem>>
    %319 = tpu.memref_squeeze %318 : memref<1x64x128xf32, #tpu.memory_space<vmem>> -> memref<64x128xf32, #tpu.memory_space<vmem>>
    %c41 = arith.constant 41 : index
    %c0_298 = arith.constant 0 : index
    %320 = tpu.strided_load %319[%c41, %c0_298] {strides = array<i32: 64, 1>} : memref<64x128xf32, #tpu.memory_space<vmem>>, vector<1x128xf32>
    %321 = arith.addf %317, %320 : vector<1x128xf32>
    %c0_i32_299 = arith.constant 0 : i32
    %c0_i32_300 = arith.constant 0 : i32
    %c0_i32_301 = arith.constant 0 : i32
    %322 = tpu.memref_slice %arg2[%c0_i32_299, %c0_i32_300, %c0_i32_301] : memref<1x64x128xf32, #tpu.memory_space<vmem>> -> memref<1x64x128xf32, #tpu.memory_space<vmem>>
    %323 = tpu.memref_squeeze %322 : memref<1x64x128xf32, #tpu.memory_space<vmem>> -> memref<64x128xf32, #tpu.memory_space<vmem>>
    %c42 = arith.constant 42 : index
    %c0_302 = arith.constant 0 : index
    %324 = tpu.strided_load %323[%c42, %c0_302] {strides = array<i32: 64, 1>} : memref<64x128xf32, #tpu.memory_space<vmem>>, vector<1x128xf32>
    %325 = arith.addf %321, %324 : vector<1x128xf32>
    %c0_i32_303 = arith.constant 0 : i32
    %c0_i32_304 = arith.constant 0 : i32
    %c0_i32_305 = arith.constant 0 : i32
    %326 = tpu.memref_slice %arg2[%c0_i32_303, %c0_i32_304, %c0_i32_305] : memref<1x64x128xf32, #tpu.memory_space<vmem>> -> memref<1x64x128xf32, #tpu.memory_space<vmem>>
    %327 = tpu.memref_squeeze %326 : memref<1x64x128xf32, #tpu.memory_space<vmem>> -> memref<64x128xf32, #tpu.memory_space<vmem>>
    %c43 = arith.constant 43 : index
    %c0_306 = arith.constant 0 : index
    %328 = tpu.strided_load %327[%c43, %c0_306] {strides = array<i32: 64, 1>} : memref<64x128xf32, #tpu.memory_space<vmem>>, vector<1x128xf32>
    %329 = arith.addf %325, %328 : vector<1x128xf32>
    %c0_i32_307 = arith.constant 0 : i32
    %c0_i32_308 = arith.constant 0 : i32
    %c0_i32_309 = arith.constant 0 : i32
    %330 = tpu.memref_slice %arg2[%c0_i32_307, %c0_i32_308, %c0_i32_309] : memref<1x64x128xf32, #tpu.memory_space<vmem>> -> memref<1x64x128xf32, #tpu.memory_space<vmem>>
    %331 = tpu.memref_squeeze %330 : memref<1x64x128xf32, #tpu.memory_space<vmem>> -> memref<64x128xf32, #tpu.memory_space<vmem>>
    %c44 = arith.constant 44 : index
    %c0_310 = arith.constant 0 : index
    %332 = tpu.strided_load %331[%c44, %c0_310] {strides = array<i32: 64, 1>} : memref<64x128xf32, #tpu.memory_space<vmem>>, vector<1x128xf32>
    %333 = arith.addf %329, %332 : vector<1x128xf32>
    %c0_i32_311 = arith.constant 0 : i32
    %c0_i32_312 = arith.constant 0 : i32
    %c0_i32_313 = arith.constant 0 : i32
    %334 = tpu.memref_slice %arg2[%c0_i32_311, %c0_i32_312, %c0_i32_313] : memref<1x64x128xf32, #tpu.memory_space<vmem>> -> memref<1x64x128xf32, #tpu.memory_space<vmem>>
    %335 = tpu.memref_squeeze %334 : memref<1x64x128xf32, #tpu.memory_space<vmem>> -> memref<64x128xf32, #tpu.memory_space<vmem>>
    %c45 = arith.constant 45 : index
    %c0_314 = arith.constant 0 : index
    %336 = tpu.strided_load %335[%c45, %c0_314] {strides = array<i32: 64, 1>} : memref<64x128xf32, #tpu.memory_space<vmem>>, vector<1x128xf32>
    %337 = arith.addf %333, %336 : vector<1x128xf32>
    %c0_i32_315 = arith.constant 0 : i32
    %c0_i32_316 = arith.constant 0 : i32
    %c0_i32_317 = arith.constant 0 : i32
    %338 = tpu.memref_slice %arg2[%c0_i32_315, %c0_i32_316, %c0_i32_317] : memref<1x64x128xf32, #tpu.memory_space<vmem>> -> memref<1x64x128xf32, #tpu.memory_space<vmem>>
    %339 = tpu.memref_squeeze %338 : memref<1x64x128xf32, #tpu.memory_space<vmem>> -> memref<64x128xf32, #tpu.memory_space<vmem>>
    %c46 = arith.constant 46 : index
    %c0_318 = arith.constant 0 : index
    %340 = tpu.strided_load %339[%c46, %c0_318] {strides = array<i32: 64, 1>} : memref<64x128xf32, #tpu.memory_space<vmem>>, vector<1x128xf32>
    %341 = arith.addf %337, %340 : vector<1x128xf32>
    %c0_i32_319 = arith.constant 0 : i32
    %c0_i32_320 = arith.constant 0 : i32
    %c0_i32_321 = arith.constant 0 : i32
    %342 = tpu.memref_slice %arg2[%c0_i32_319, %c0_i32_320, %c0_i32_321] : memref<1x64x128xf32, #tpu.memory_space<vmem>> -> memref<1x64x128xf32, #tpu.memory_space<vmem>>
    %343 = tpu.memref_squeeze %342 : memref<1x64x128xf32, #tpu.memory_space<vmem>> -> memref<64x128xf32, #tpu.memory_space<vmem>>
    %c47 = arith.constant 47 : index
    %c0_322 = arith.constant 0 : index
    %344 = tpu.strided_load %343[%c47, %c0_322] {strides = array<i32: 64, 1>} : memref<64x128xf32, #tpu.memory_space<vmem>>, vector<1x128xf32>
    %345 = arith.addf %341, %344 : vector<1x128xf32>
    %c0_i32_323 = arith.constant 0 : i32
    %c0_i32_324 = arith.constant 0 : i32
    %c0_i32_325 = arith.constant 0 : i32
    %346 = tpu.memref_slice %arg2[%c0_i32_323, %c0_i32_324, %c0_i32_325] : memref<1x64x128xf32, #tpu.memory_space<vmem>> -> memref<1x64x128xf32, #tpu.memory_space<vmem>>
    %347 = tpu.memref_squeeze %346 : memref<1x64x128xf32, #tpu.memory_space<vmem>> -> memref<64x128xf32, #tpu.memory_space<vmem>>
    %c48 = arith.constant 48 : index
    %c0_326 = arith.constant 0 : index
    %348 = tpu.strided_load %347[%c48, %c0_326] {strides = array<i32: 64, 1>} : memref<64x128xf32, #tpu.memory_space<vmem>>, vector<1x128xf32>
    %349 = arith.addf %345, %348 : vector<1x128xf32>
    %c0_i32_327 = arith.constant 0 : i32
    %c0_i32_328 = arith.constant 0 : i32
    %c0_i32_329 = arith.constant 0 : i32
    %350 = tpu.memref_slice %arg2[%c0_i32_327, %c0_i32_328, %c0_i32_329] : memref<1x64x128xf32, #tpu.memory_space<vmem>> -> memref<1x64x128xf32, #tpu.memory_space<vmem>>
    %351 = tpu.memref_squeeze %350 : memref<1x64x128xf32, #tpu.memory_space<vmem>> -> memref<64x128xf32, #tpu.memory_space<vmem>>
    %c49 = arith.constant 49 : index
    %c0_330 = arith.constant 0 : index
    %352 = tpu.strided_load %351[%c49, %c0_330] {strides = array<i32: 64, 1>} : memref<64x128xf32, #tpu.memory_space<vmem>>, vector<1x128xf32>
    %353 = arith.addf %349, %352 : vector<1x128xf32>
    %c0_i32_331 = arith.constant 0 : i32
    %c0_i32_332 = arith.constant 0 : i32
    %c0_i32_333 = arith.constant 0 : i32
    %354 = tpu.memref_slice %arg2[%c0_i32_331, %c0_i32_332, %c0_i32_333] : memref<1x64x128xf32, #tpu.memory_space<vmem>> -> memref<1x64x128xf32, #tpu.memory_space<vmem>>
    %355 = tpu.memref_squeeze %354 : memref<1x64x128xf32, #tpu.memory_space<vmem>> -> memref<64x128xf32, #tpu.memory_space<vmem>>
    %c50 = arith.constant 50 : index
    %c0_334 = arith.constant 0 : index
    %356 = tpu.strided_load %355[%c50, %c0_334] {strides = array<i32: 64, 1>} : memref<64x128xf32, #tpu.memory_space<vmem>>, vector<1x128xf32>
    %357 = arith.addf %353, %356 : vector<1x128xf32>
    %c0_i32_335 = arith.constant 0 : i32
    %c0_i32_336 = arith.constant 0 : i32
    %c0_i32_337 = arith.constant 0 : i32
    %358 = tpu.memref_slice %arg2[%c0_i32_335, %c0_i32_336, %c0_i32_337] : memref<1x64x128xf32, #tpu.memory_space<vmem>> -> memref<1x64x128xf32, #tpu.memory_space<vmem>>
    %359 = tpu.memref_squeeze %358 : memref<1x64x128xf32, #tpu.memory_space<vmem>> -> memref<64x128xf32, #tpu.memory_space<vmem>>
    %c51 = arith.constant 51 : index
    %c0_338 = arith.constant 0 : index
    %360 = tpu.strided_load %359[%c51, %c0_338] {strides = array<i32: 64, 1>} : memref<64x128xf32, #tpu.memory_space<vmem>>, vector<1x128xf32>
    %361 = arith.addf %357, %360 : vector<1x128xf32>
    %c0_i32_339 = arith.constant 0 : i32
    %c0_i32_340 = arith.constant 0 : i32
    %c0_i32_341 = arith.constant 0 : i32
    %362 = tpu.memref_slice %arg2[%c0_i32_339, %c0_i32_340, %c0_i32_341] : memref<1x64x128xf32, #tpu.memory_space<vmem>> -> memref<1x64x128xf32, #tpu.memory_space<vmem>>
    %363 = tpu.memref_squeeze %362 : memref<1x64x128xf32, #tpu.memory_space<vmem>> -> memref<64x128xf32, #tpu.memory_space<vmem>>
    %c52 = arith.constant 52 : index
    %c0_342 = arith.constant 0 : index
    %364 = tpu.strided_load %363[%c52, %c0_342] {strides = array<i32: 64, 1>} : memref<64x128xf32, #tpu.memory_space<vmem>>, vector<1x128xf32>
    %365 = arith.addf %361, %364 : vector<1x128xf32>
    %c0_i32_343 = arith.constant 0 : i32
    %c0_i32_344 = arith.constant 0 : i32
    %c0_i32_345 = arith.constant 0 : i32
    %366 = tpu.memref_slice %arg2[%c0_i32_343, %c0_i32_344, %c0_i32_345] : memref<1x64x128xf32, #tpu.memory_space<vmem>> -> memref<1x64x128xf32, #tpu.memory_space<vmem>>
    %367 = tpu.memref_squeeze %366 : memref<1x64x128xf32, #tpu.memory_space<vmem>> -> memref<64x128xf32, #tpu.memory_space<vmem>>
    %c53 = arith.constant 53 : index
    %c0_346 = arith.constant 0 : index
    %368 = tpu.strided_load %367[%c53, %c0_346] {strides = array<i32: 64, 1>} : memref<64x128xf32, #tpu.memory_space<vmem>>, vector<1x128xf32>
    %369 = arith.addf %365, %368 : vector<1x128xf32>
    %c0_i32_347 = arith.constant 0 : i32
    %c0_i32_348 = arith.constant 0 : i32
    %c0_i32_349 = arith.constant 0 : i32
    %370 = tpu.memref_slice %arg2[%c0_i32_347, %c0_i32_348, %c0_i32_349] : memref<1x64x128xf32, #tpu.memory_space<vmem>> -> memref<1x64x128xf32, #tpu.memory_space<vmem>>
    %371 = tpu.memref_squeeze %370 : memref<1x64x128xf32, #tpu.memory_space<vmem>> -> memref<64x128xf32, #tpu.memory_space<vmem>>
    %c54 = arith.constant 54 : index
    %c0_350 = arith.constant 0 : index
    %372 = tpu.strided_load %371[%c54, %c0_350] {strides = array<i32: 64, 1>} : memref<64x128xf32, #tpu.memory_space<vmem>>, vector<1x128xf32>
    %373 = arith.addf %369, %372 : vector<1x128xf32>
    %c0_i32_351 = arith.constant 0 : i32
    %c0_i32_352 = arith.constant 0 : i32
    %c0_i32_353 = arith.constant 0 : i32
    %374 = tpu.memref_slice %arg2[%c0_i32_351, %c0_i32_352, %c0_i32_353] : memref<1x64x128xf32, #tpu.memory_space<vmem>> -> memref<1x64x128xf32, #tpu.memory_space<vmem>>
    %375 = tpu.memref_squeeze %374 : memref<1x64x128xf32, #tpu.memory_space<vmem>> -> memref<64x128xf32, #tpu.memory_space<vmem>>
    %c55 = arith.constant 55 : index
    %c0_354 = arith.constant 0 : index
    %376 = tpu.strided_load %375[%c55, %c0_354] {strides = array<i32: 64, 1>} : memref<64x128xf32, #tpu.memory_space<vmem>>, vector<1x128xf32>
    %377 = arith.addf %373, %376 : vector<1x128xf32>
    %c0_i32_355 = arith.constant 0 : i32
    %c0_i32_356 = arith.constant 0 : i32
    %c0_i32_357 = arith.constant 0 : i32
    %378 = tpu.memref_slice %arg2[%c0_i32_355, %c0_i32_356, %c0_i32_357] : memref<1x64x128xf32, #tpu.memory_space<vmem>> -> memref<1x64x128xf32, #tpu.memory_space<vmem>>
    %379 = tpu.memref_squeeze %378 : memref<1x64x128xf32, #tpu.memory_space<vmem>> -> memref<64x128xf32, #tpu.memory_space<vmem>>
    %c56 = arith.constant 56 : index
    %c0_358 = arith.constant 0 : index
    %380 = tpu.strided_load %379[%c56, %c0_358] {strides = array<i32: 64, 1>} : memref<64x128xf32, #tpu.memory_space<vmem>>, vector<1x128xf32>
    %381 = arith.addf %377, %380 : vector<1x128xf32>
    %c0_i32_359 = arith.constant 0 : i32
    %c0_i32_360 = arith.constant 0 : i32
    %c0_i32_361 = arith.constant 0 : i32
    %382 = tpu.memref_slice %arg2[%c0_i32_359, %c0_i32_360, %c0_i32_361] : memref<1x64x128xf32, #tpu.memory_space<vmem>> -> memref<1x64x128xf32, #tpu.memory_space<vmem>>
    %383 = tpu.memref_squeeze %382 : memref<1x64x128xf32, #tpu.memory_space<vmem>> -> memref<64x128xf32, #tpu.memory_space<vmem>>
    %c57 = arith.constant 57 : index
    %c0_362 = arith.constant 0 : index
    %384 = tpu.strided_load %383[%c57, %c0_362] {strides = array<i32: 64, 1>} : memref<64x128xf32, #tpu.memory_space<vmem>>, vector<1x128xf32>
    %385 = arith.addf %381, %384 : vector<1x128xf32>
    %c0_i32_363 = arith.constant 0 : i32
    %c0_i32_364 = arith.constant 0 : i32
    %c0_i32_365 = arith.constant 0 : i32
    %386 = tpu.memref_slice %arg2[%c0_i32_363, %c0_i32_364, %c0_i32_365] : memref<1x64x128xf32, #tpu.memory_space<vmem>> -> memref<1x64x128xf32, #tpu.memory_space<vmem>>
    %387 = tpu.memref_squeeze %386 : memref<1x64x128xf32, #tpu.memory_space<vmem>> -> memref<64x128xf32, #tpu.memory_space<vmem>>
    %c58 = arith.constant 58 : index
    %c0_366 = arith.constant 0 : index
    %388 = tpu.strided_load %387[%c58, %c0_366] {strides = array<i32: 64, 1>} : memref<64x128xf32, #tpu.memory_space<vmem>>, vector<1x128xf32>
    %389 = arith.addf %385, %388 : vector<1x128xf32>
    %c0_i32_367 = arith.constant 0 : i32
    %c0_i32_368 = arith.constant 0 : i32
    %c0_i32_369 = arith.constant 0 : i32
    %390 = tpu.memref_slice %arg2[%c0_i32_367, %c0_i32_368, %c0_i32_369] : memref<1x64x128xf32, #tpu.memory_space<vmem>> -> memref<1x64x128xf32, #tpu.memory_space<vmem>>
    %391 = tpu.memref_squeeze %390 : memref<1x64x128xf32, #tpu.memory_space<vmem>> -> memref<64x128xf32, #tpu.memory_space<vmem>>
    %c59 = arith.constant 59 : index
    %c0_370 = arith.constant 0 : index
    %392 = tpu.strided_load %391[%c59, %c0_370] {strides = array<i32: 64, 1>} : memref<64x128xf32, #tpu.memory_space<vmem>>, vector<1x128xf32>
    %393 = arith.addf %389, %392 : vector<1x128xf32>
    %c0_i32_371 = arith.constant 0 : i32
    %c0_i32_372 = arith.constant 0 : i32
    %c0_i32_373 = arith.constant 0 : i32
    %394 = tpu.memref_slice %arg2[%c0_i32_371, %c0_i32_372, %c0_i32_373] : memref<1x64x128xf32, #tpu.memory_space<vmem>> -> memref<1x64x128xf32, #tpu.memory_space<vmem>>
    %395 = tpu.memref_squeeze %394 : memref<1x64x128xf32, #tpu.memory_space<vmem>> -> memref<64x128xf32, #tpu.memory_space<vmem>>
    %c60 = arith.constant 60 : index
    %c0_374 = arith.constant 0 : index
    %396 = tpu.strided_load %395[%c60, %c0_374] {strides = array<i32: 64, 1>} : memref<64x128xf32, #tpu.memory_space<vmem>>, vector<1x128xf32>
    %397 = arith.addf %393, %396 : vector<1x128xf32>
    %c0_i32_375 = arith.constant 0 : i32
    %c0_i32_376 = arith.constant 0 : i32
    %c0_i32_377 = arith.constant 0 : i32
    %398 = tpu.memref_slice %arg2[%c0_i32_375, %c0_i32_376, %c0_i32_377] : memref<1x64x128xf32, #tpu.memory_space<vmem>> -> memref<1x64x128xf32, #tpu.memory_space<vmem>>
    %399 = tpu.memref_squeeze %398 : memref<1x64x128xf32, #tpu.memory_space<vmem>> -> memref<64x128xf32, #tpu.memory_space<vmem>>
    %c61 = arith.constant 61 : index
    %c0_378 = arith.constant 0 : index
    %400 = tpu.strided_load %399[%c61, %c0_378] {strides = array<i32: 64, 1>} : memref<64x128xf32, #tpu.memory_space<vmem>>, vector<1x128xf32>
    %401 = arith.addf %397, %400 : vector<1x128xf32>
    %c0_i32_379 = arith.constant 0 : i32
    %c0_i32_380 = arith.constant 0 : i32
    %c0_i32_381 = arith.constant 0 : i32
    %402 = tpu.memref_slice %arg2[%c0_i32_379, %c0_i32_380, %c0_i32_381] : memref<1x64x128xf32, #tpu.memory_space<vmem>> -> memref<1x64x128xf32, #tpu.memory_space<vmem>>
    %403 = tpu.memref_squeeze %402 : memref<1x64x128xf32, #tpu.memory_space<vmem>> -> memref<64x128xf32, #tpu.memory_space<vmem>>
    %c62 = arith.constant 62 : index
    %c0_382 = arith.constant 0 : index
    %404 = tpu.strided_load %403[%c62, %c0_382] {strides = array<i32: 64, 1>} : memref<64x128xf32, #tpu.memory_space<vmem>>, vector<1x128xf32>
    %405 = arith.addf %401, %404 : vector<1x128xf32>
    %c0_i32_383 = arith.constant 0 : i32
    %c0_i32_384 = arith.constant 0 : i32
    %c0_i32_385 = arith.constant 0 : i32
    %406 = tpu.memref_slice %arg2[%c0_i32_383, %c0_i32_384, %c0_i32_385] : memref<1x64x128xf32, #tpu.memory_space<vmem>> -> memref<1x64x128xf32, #tpu.memory_space<vmem>>
    %407 = tpu.memref_squeeze %406 : memref<1x64x128xf32, #tpu.memory_space<vmem>> -> memref<64x128xf32, #tpu.memory_space<vmem>>
    %c63 = arith.constant 63 : index
    %c0_386 = arith.constant 0 : index
    %408 = tpu.strided_load %407[%c63, %c0_386] {strides = array<i32: 64, 1>} : memref<64x128xf32, #tpu.memory_space<vmem>>, vector<1x128xf32>
    %409 = arith.addf %405, %408 : vector<1x128xf32>
    %cst_387 = arith.constant 1.562500e-02 : f32
    %410 = vector.broadcast %cst_387 : f32 to vector<1x128xf32>
    %411 = arith.mulf %409, %410 : vector<1x128xf32>
    %cst_388 = arith.constant dense<0.000000e+00> : vector<1xf32>
    %412 = vector.multi_reduction <add>, %411, %cst_388 [1] : vector<1x128xf32> to vector<1xf32>
    %413 = vector.shape_cast %412 : vector<1xf32> to vector<1x1xf32>
    %cst_389 = arith.constant 1.280000e+02 : f32
    %414 = vector.broadcast %cst_389 : f32 to vector<1x1xf32>
    %415 = arith.divf %413, %414 : vector<1x1xf32>
    %416 = vector.broadcast %415 : vector<1x1xf32> to vector<1x128xf32>
    %417 = arith.subf %411, %416 : vector<1x128xf32>
    %418 = arith.mulf %417, %417 : vector<1x128xf32>
    %cst_390 = arith.constant dense<0.000000e+00> : vector<1xf32>
    %419 = vector.multi_reduction <add>, %418, %cst_390 [1] : vector<1x128xf32> to vector<1xf32>
    %420 = vector.shape_cast %419 : vector<1xf32> to vector<1x1xf32>
    %cst_391 = arith.constant 1.280000e+02 : f32
    %421 = vector.broadcast %cst_391 : f32 to vector<1x1xf32>
    %422 = arith.divf %420, %421 : vector<1x1xf32>
    %cst_392 = arith.constant 9.99999974E-6 : f32
    %423 = vector.broadcast %cst_392 : f32 to vector<1x1xf32>
    %424 = arith.addf %422, %423 : vector<1x1xf32>
    %425 = math.rsqrt %424 : vector<1x1xf32>
    %426 = vector.broadcast %425 : vector<1x1xf32> to vector<1x128xf32>
    %427 = arith.mulf %417, %426 : vector<1x128xf32>
    %428 = arith.mulf %427, %0 : vector<1x128xf32>
    %429 = arith.addf %428, %1 : vector<1x128xf32>
    %c0_393 = arith.constant 0 : index
    %c0_394 = arith.constant 0 : index
    %c0_395 = arith.constant 0 : index
    %430 = vector.load %arg9[%c0_393, %c0_394, %c0_395] : memref<1x1x128xf32, #tpu.memory_space<vmem>>, vector<1x1x128xf32>
    %431 = vector.shape_cast %430 : vector<1x1x128xf32> to vector<1x128xf32>
    %432 = vector.shape_cast %429 : vector<1x128xf32> to vector<1x1x128xf32>
    tpu.vector_store %arg9[%c0_393, %c0_394, %c0_395], %432 {strides = array<i32>} : memref<1x1x128xf32, #tpu.memory_space<vmem>>, vector<1x1x128xf32>,
    %c1_i32 = arith.constant 1 : i32
    %433 = arith.muli %arg0, %c1_i32 : i32
    %c64_i32 = arith.constant 64 : i32
    %434 = arith.muli %arg1, %c64_i32 : i32
    %c0_i32_396 = arith.constant 0 : i32
    %435 = arith.addi %c0_i32_396, %434 : i32
    %c0_i32_397 = arith.constant 0 : i32
    %c0_i32_398 = arith.constant 0 : i32
    %436 = tpu.memref_slice %arg5[%433, %435, %c0_i32_398] : memref<2x85x128xf32, #tpu.memory_space<any>> -> memref<1x64x128xf32, #tpu.memory_space<any>>
    %437 = tpu.memref_slice %arg10[%c0_i32_397] : memref<4x!tpu.dma_semaphore, #tpu.memory_space<semaphore_mem>> -> memref<1x!tpu.dma_semaphore, #tpu.memory_space<semaphore_mem>>
    %438 = tpu.memref_squeeze %437 : memref<1x!tpu.dma_semaphore, #tpu.memory_space<semaphore_mem>> -> memref<!tpu.dma_semaphore, #tpu.memory_space<semaphore_mem>>
    tpu.enqueue_dma source(%arg6 : memref<1x64x128xf32, #tpu.memory_space<vmem>>) target(%436 : memref<1x64x128xf32, #tpu.memory_space<any>>) target_semaphore(%438 : memref<!tpu.dma_semaphore, #tpu.memory_space<semaphore_mem>>)
    %c16_i32 = arith.constant 16 : i32
    %439 = arith.muli %arg1, %c16_i32 : i32
    %c64_i32_399 = arith.constant 64 : i32
    %440 = arith.addi %c64_i32_399, %439 : i32
    %c1_i32_400 = arith.constant 1 : i32
    %c0_i32_401 = arith.constant 0 : i32
    %441 = tpu.memref_slice %arg5[%433, %440, %c0_i32_401] : memref<2x85x128xf32, #tpu.memory_space<any>> -> memref<1x16x128xf32, #tpu.memory_space<any>>
    %442 = tpu.memref_slice %arg10[%c1_i32_400] : memref<4x!tpu.dma_semaphore, #tpu.memory_space<semaphore_mem>> -> memref<1x!tpu.dma_semaphore, #tpu.memory_space<semaphore_mem>>
    %443 = tpu.memref_squeeze %442 : memref<1x!tpu.dma_semaphore, #tpu.memory_space<semaphore_mem>> -> memref<!tpu.dma_semaphore, #tpu.memory_space<semaphore_mem>>
    tpu.enqueue_dma source(%arg7 : memref<1x16x128xf32, #tpu.memory_space<vmem>>) target(%441 : memref<1x16x128xf32, #tpu.memory_space<any>>) target_semaphore(%443 : memref<!tpu.dma_semaphore, #tpu.memory_space<semaphore_mem>>)
    %c4_i32 = arith.constant 4 : i32
    %444 = arith.muli %arg1, %c4_i32 : i32
    %c80_i32 = arith.constant 80 : i32
    %445 = arith.addi %c80_i32, %444 : i32
    %c2_i32 = arith.constant 2 : i32
    %c0_i32_402 = arith.constant 0 : i32
    %446 = tpu.memref_slice %arg5[%433, %445, %c0_i32_402] : memref<2x85x128xf32, #tpu.memory_space<any>> -> memref<1x4x128xf32, #tpu.memory_space<any>>
    %447 = tpu.memref_slice %arg10[%c2_i32] : memref<4x!tpu.dma_semaphore, #tpu.memory_space<semaphore_mem>> -> memref<1x!tpu.dma_semaphore, #tpu.memory_space<semaphore_mem>>
    %448 = tpu.memref_squeeze %447 : memref<1x!tpu.dma_semaphore, #tpu.memory_space<semaphore_mem>> -> memref<!tpu.dma_semaphore, #tpu.memory_space<semaphore_mem>>
    tpu.enqueue_dma source(%arg8 : memref<1x4x128xf32, #tpu.memory_space<vmem>>) target(%446 : memref<1x4x128xf32, #tpu.memory_space<any>>) target_semaphore(%448 : memref<!tpu.dma_semaphore, #tpu.memory_space<semaphore_mem>>)
    %c1_i32_403 = arith.constant 1 : i32
    %449 = arith.muli %arg1, %c1_i32_403 : i32
    %c84_i32 = arith.constant 84 : i32
    %450 = arith.addi %c84_i32, %449 : i32
    %c3_i32 = arith.constant 3 : i32
    %c0_i32_404 = arith.constant 0 : i32
    %451 = tpu.memref_slice %arg5[%433, %450, %c0_i32_404] : memref<2x85x128xf32, #tpu.memory_space<any>> -> memref<1x1x128xf32, #tpu.memory_space<any>>
    %452 = tpu.memref_slice %arg10[%c3_i32] : memref<4x!tpu.dma_semaphore, #tpu.memory_space<semaphore_mem>> -> memref<1x!tpu.dma_semaphore, #tpu.memory_space<semaphore_mem>>
    %453 = tpu.memref_squeeze %452 : memref<1x!tpu.dma_semaphore, #tpu.memory_space<semaphore_mem>> -> memref<!tpu.dma_semaphore, #tpu.memory_space<semaphore_mem>>
    tpu.enqueue_dma source(%arg9 : memref<1x1x128xf32, #tpu.memory_space<vmem>>) target(%451 : memref<1x1x128xf32, #tpu.memory_space<any>>) target_semaphore(%453 : memref<!tpu.dma_semaphore, #tpu.memory_space<semaphore_mem>>)
    %c0_i32_405 = arith.constant 0 : i32
    %c0_i32_406 = arith.constant 0 : i32
    %454 = tpu.memref_slice %arg5[%433, %435, %c0_i32_406] : memref<2x85x128xf32, #tpu.memory_space<any>> -> memref<1x64x128xf32, #tpu.memory_space<any>>
    %455 = tpu.memref_slice %arg10[%c0_i32_405] : memref<4x!tpu.dma_semaphore, #tpu.memory_space<semaphore_mem>> -> memref<1x!tpu.dma_semaphore, #tpu.memory_space<semaphore_mem>>
    %456 = tpu.memref_squeeze %455 : memref<1x!tpu.dma_semaphore, #tpu.memory_space<semaphore_mem>> -> memref<!tpu.dma_semaphore, #tpu.memory_space<semaphore_mem>>
    tpu.wait_dma2 semaphore(%456 : memref<!tpu.dma_semaphore, #tpu.memory_space<semaphore_mem>>) src(%arg6 : memref<1x64x128xf32, #tpu.memory_space<vmem>>) dst(%454 : memref<1x64x128xf32, #tpu.memory_space<any>>)
    %c1_i32_407 = arith.constant 1 : i32
    %c0_i32_408 = arith.constant 0 : i32
    %457 = tpu.memref_slice %arg5[%433, %440, %c0_i32_408] : memref<2x85x128xf32, #tpu.memory_space<any>> -> memref<1x16x128xf32, #tpu.memory_space<any>>
    %458 = tpu.memref_slice %arg10[%c1_i32_407] : memref<4x!tpu.dma_semaphore, #tpu.memory_space<semaphore_mem>> -> memref<1x!tpu.dma_semaphore, #tpu.memory_space<semaphore_mem>>
    %459 = tpu.memref_squeeze %458 : memref<1x!tpu.dma_semaphore, #tpu.memory_space<semaphore_mem>> -> memref<!tpu.dma_semaphore, #tpu.memory_space<semaphore_mem>>
    tpu.wait_dma2 semaphore(%459 : memref<!tpu.dma_semaphore, #tpu.memory_space<semaphore_mem>>) src(%arg7 : memref<1x16x128xf32, #tpu.memory_space<vmem>>) dst(%457 : memref<1x16x128xf32, #tpu.memory_space<any>>)
    %c2_i32_409 = arith.constant 2 : i32
    %c0_i32_410 = arith.constant 0 : i32
    %460 = tpu.memref_slice %arg5[%433, %445, %c0_i32_410] : memref<2x85x128xf32, #tpu.memory_space<any>> -> memref<1x4x128xf32, #tpu.memory_space<any>>
    %461 = tpu.memref_slice %arg10[%c2_i32_409] : memref<4x!tpu.dma_semaphore, #tpu.memory_space<semaphore_mem>> -> memref<1x!tpu.dma_semaphore, #tpu.memory_space<semaphore_mem>>
    %462 = tpu.memref_squeeze %461 : memref<1x!tpu.dma_semaphore, #tpu.memory_space<semaphore_mem>> -> memref<!tpu.dma_semaphore, #tpu.memory_space<semaphore_mem>>
    tpu.wait_dma2 semaphore(%462 : memref<!tpu.dma_semaphore, #tpu.memory_space<semaphore_mem>>) src(%arg8 : memref<1x4x128xf32, #tpu.memory_space<vmem>>) dst(%460 : memref<1x4x128xf32, #tpu.memory_space<any>>)
    %c3_i32_411 = arith.constant 3 : i32
    %c0_i32_412 = arith.constant 0 : i32
    %463 = tpu.memref_slice %arg5[%433, %450, %c0_i32_412] : memref<2x85x128xf32, #tpu.memory_space<any>> -> memref<1x1x128xf32, #tpu.memory_space<any>>
    %464 = tpu.memref_slice %arg10[%c3_i32_411] : memref<4x!tpu.dma_semaphore, #tpu.memory_space<semaphore_mem>> -> memref<1x!tpu.dma_semaphore, #tpu.memory_space<semaphore_mem>>
    %465 = tpu.memref_squeeze %464 : memref<1x!tpu.dma_semaphore, #tpu.memory_space<semaphore_mem>> -> memref<!tpu.dma_semaphore, #tpu.memory_space<semaphore_mem>>
    tpu.wait_dma2 semaphore(%465 : memref<!tpu.dma_semaphore, #tpu.memory_space<semaphore_mem>>) src(%arg9 : memref<1x1x128xf32, #tpu.memory_space<vmem>>) dst(%463 : memref<1x1x128xf32, #tpu.memory_space<any>>)
    return
  }
  func.func @transform_0(%arg0: i32, %arg1: i32) -> (i32, i32, i32) {
    %c0_i32 = arith.constant 0 : i32
    %c0_i32_0 = arith.constant 0 : i32
    return %arg0, %arg1, %c0_i32 : i32, i32, i32
  }
  func.func @transform_1(%arg0: i32, %arg1: i32) -> (i32, i32) {
    %c0_i32 = arith.constant 0 : i32
    %c0_i32_0 = arith.constant 0 : i32
    %c0_i32_1 = arith.constant 0 : i32
    return %c0_i32, %c0_i32_0 : i32, i32
  }
  func.func @transform_2(%arg0: i32, %arg1: i32) -> (i32, i32) {
    %c0_i32 = arith.constant 0 : i32
    %c0_i32_0 = arith.constant 0 : i32
    %c0_i32_1 = arith.constant 0 : i32
    return %c0_i32, %c0_i32_0 : i32, i32
  }
}

</mosaic_0001>

<llo_original>
// kernel: tpu_custom_call.1
$region0: #{tpu_custom_call.1}
  #allocation0 [shape = 'u32[]', space=smem, size = 0x4, offset = 0x4, fixed_abs, tag = 'smem constant byte address 0x4 - core index']
  #allocation1 [shape = 'u32[72,128]{1,0:T(1,128)}', space=vmem, size = 0x9000, scoped, tag = 'internal scratch']
  #allocation2 [shape = 'f32[1,64,128]{2,1,0:T(8,128)}', space=vmem, size = 0x8000, scoped, tag = 'scratch operand']
  #allocation3 [shape = 'f32[1,16,128]{2,1,0:T(8,128)}', space=vmem, size = 0x2000, scoped, tag = 'scratch operand']
  #allocation4 [shape = 'f32[1,4,128]{2,1,0:T(4,128)}', space=vmem, size = 0x800, scoped, tag = 'scratch operand']
  #allocation5 [shape = 'f32[1,1,128]{2,1,0:T(1,128)}', space=vmem, size = 0x200, scoped, tag = 'scratch operand']
  #allocation6 [shape = 's32[4]{0}', space=sflag, size = 0x10, scoped, tag = 'scratch operand']
  #allocation11 [shape = 's32[]', space=sflag, size = 0x4, offset = 0, fixed_abs, tag = 'sflag constant byte address 0x0 - dummy sync flag']
  #allocation12 [shape = 's32[]', space=sflag, size = 0x4, offset = 0, fixed_abs, tag = 'sflag constant byte address 0x0 - dummy sync flag']
  #allocation13 [shape = 's32[]', space=sflag, size = 0x4, offset = 0, fixed_abs, tag = 'sflag constant byte address 0x0 - dummy sync flag']
  #allocation14 [shape = 's32[]', space=sflag, size = 0x4, offset = 0, fixed_abs, tag = 'sflag constant byte address 0x0 - dummy sync flag']
  %s0 = inlined_call_operand.hbm [shape: f32[2,64,128], index: 0, kind: input, shape index: {}]
  %s1 = inlined_call_operand.hbm [shape: f32[1,128], index: 1, kind: input, shape index: {}]
  %s2 = inlined_call_operand.vmem [shape: f32[1,128], index: 2, kind: input, shape index: {}]
  %s3 = inlined_call_operand.vmem [shape: f32[2,85,128], index: 3, kind: output, shape index: {}]
  %s4 = sld [smem:[#allocation0]]
  $region139: #{tpu_custom_call.1} parent=0
    _
  %s6 = ssub.s32 1, %s4
  %s7 = scalar_select 0, %s6, %s4
  $region1: #{tpu_custom_call.1} parent=0
    #allocation7 [shape = 'u8[65536]{0}', space=vmem, size = 0x10000, scoped, tag = 'input window, operand 0']
    #allocation8 [shape = 's32[2]{0}', space=sflag, size = 0x8, scoped, tag = 'scoped memory for tpu_custom_call.1']
    #allocation9 [shape = 'u8[512]{0}', space=vmem, size = 0x400, scoped, tag = 'input window, operand 1, single buffered']
    #allocation10 [shape = 's32[1]{0}', space=sflag, size = 0x4, scoped, tag = 'scoped memory for tpu_custom_call.1']
    %8 = vsyncpa [#allocation8], 0
    %s9 = scalar_lea.sflag [#allocation8], 1
    %10 = vsyncpa %s9, 0
    %11 = vsyncpa [#allocation10], 0
    loop: start=0, step=1, limit=3
    $region2: #{tpu_custom_call.1} parent=1 // loop_pre_header
      _
    $region3: #{tpu_custom_call.1} parent=1 // loop_header
      %s13 = sphi 0, %s17
      %p14 = scmp.ge.s32.totalorder %s13, 3
      %s19 = sphi 0, %s29
      %s20 = sphi 0, %s25
      %s21 = sphi 0, %s19
      %s22 = sphi 0, %s20
      %s34 = sphi 0, %s36
      %s37 = sphi 0, %s34
      %s47 = sphi 0, %s37
      %s51 = sphi 0, %s51
      %s53 = sphi 0, %s51
      %s61 = sphi 0, %s53
      %s65 = sphi 0, %s65
      %s67 = sphi 0, %s65
      %s75 = sphi 0, %s67
    $region4: #{tpu_custom_call.1} parent=1 // loop_header_branch
      %16 = sbr.rel (%p14) target = $region8
    $region5: #{tpu_custom_call.1} parent=1 // loop_body
      %s18 = ssub.s32 %s13, 1
      %s23 = sadd.s32 1, %s20
      %p24 = scmp.ge.s32.totalorder %s23, 1
      %s25 = scalar_select %p24, 0, %s23
      %s26 = sadd.s32 1, %s19
      %s27 = scalar_select %p24, %s26, %s19
      %p28 = scmp.ge.s32.totalorder %s27, 2
      %s29 = scalar_select %p28, 0, %s27
      %s30 = ssub.s32 %s19, %s29
      %s31 = ssub.s32 %s20, %s25
      %s32 = sor.u32 %s30, %s31
      %p33 = scmp.eq.s32.totalorder %s32, 0
      %s35 = sadd.s32 %s34, 1
      %s36 = scalar_select %p33, %s34, %s35
      %p38 = pneg %p33
      %p39 = scmp.eq.s32.totalorder %s13, 1
      %p40 = por %p38, %p39
      %p41 = scmp.ne.s32.totalorder %s34, %s37
      %p42 = scmp.eq.s32.totalorder %s13, 0
      %p43 = por %p41, %p42
      %p44 = scmp.ne.s32.totalorder %s34, %s37
      %p45 = scmp.eq.s32.totalorder %s18, 1
      %p46 = por %p44, %p45
      %p48 = scmp.ne.s32.totalorder %s37, %s47
      %p49 = scmp.eq.s32.totalorder %s18, 0
      %p50 = por %p48, %p49
      %s52 = sadd.s32 %s51, 1
      %p54 = scmp.eq.s32.totalorder %s13, 1
      %p55 = scmp.ne.s32.totalorder %s51, %s53
      %p56 = scmp.eq.s32.totalorder %s13, 0
      %p57 = por %p55, %p56
      %p58 = scmp.ne.s32.totalorder %s51, %s53
      %p59 = scmp.eq.s32.totalorder %s18, 1
      %p60 = por %p58, %p59
      %p62 = scmp.ne.s32.totalorder %s53, %s61
      %p63 = scmp.eq.s32.totalorder %s18, 0
      %p64 = por %p62, %p63
      %s66 = sadd.s32 %s65, 1
      %p68 = scmp.eq.s32.totalorder %s13, 1
      %p69 = scmp.ne.s32.totalorder %s65, %s67
      %p70 = scmp.eq.s32.totalorder %s13, 0
      %p71 = por %p69, %p70
      %p72 = scmp.ne.s32.totalorder %s65, %s67
      %p73 = scmp.eq.s32.totalorder %s18, 1
      %p74 = por %p72, %p73
      %p76 = scmp.ne.s32.totalorder %s67, %s75
      %p77 = scmp.eq.s32.totalorder %s18, 0
      %p78 = por %p76, %p77
      %p79 = scmp.le.s32.totalorder 1, %s13
      // Predicated region
      $region9: #{tpu_custom_call.1} parent=5 // pred_check
        %p80 = pneg %p79
      $region10: #{tpu_custom_call.1} parent=5 // pred_check_branch
        %82 = sbr.rel (%p80) target = $region12
      $region11: #{tpu_custom_call.1} parent=5 // pred_region
        %s83 = ssub.s32 %s13, 1
        // Predicated region
        $region13: #{tpu_custom_call.1} parent=11 // pred_check
          %p84 = pneg %p64
        $region14: #{tpu_custom_call.1} parent=11 // pred_check_branch
          %86 = sbr.rel (%p84) target = $region16
        $region15: #{tpu_custom_call.1} parent=11 // pred_region
          %88 = vsyncadd [#allocation10], 0
          %s90 = sshll.u32 %s1, 4
          %s91 = int_to_ptr.hbm [resolvable:$true] %s90
          %s92 = sshll.u32 [#allocation9], 4
          %s93 = int_to_ptr.vmem [resolvable:$true] %s92
          %95 = dma.hbm_to_vmem [thread:$0]  %s91, 16, %s93, [#allocation10]
        $region16: #{tpu_custom_call.1} parent=11 // pred_fallthru
          _
        // Predicated region
        $region17: #{tpu_custom_call.1} parent=11 // pred_check
          %p96 = pneg %p78
        $region18: #{tpu_custom_call.1} parent=11 // pred_check_branch
          %98 = sbr.rel (%p96) target = $region20
        $region19: #{tpu_custom_call.1} parent=11 // pred_region
          _
        $region20: #{tpu_custom_call.1} parent=11 // pred_fallthru
          _
      $region12: #{tpu_custom_call.1} parent=5 // pred_fallthru
        _
      %p99 = scmp.lt.s32.totalorder %s13, 2
      // Predicated region
      $region21: #{tpu_custom_call.1} parent=5 // pred_check
        %p100 = pneg %p99
      $region22: #{tpu_custom_call.1} parent=5 // pred_check_branch
        %102 = sbr.rel (%p100) target = $region24
      $region23: #{tpu_custom_call.1} parent=5 // pred_region
        // Predicated region
        $region25: #{tpu_custom_call.1} parent=23 // pred_check
          %p103 = pneg %p43
        $region26: #{tpu_custom_call.1} parent=23 // pred_check_branch
          %105 = sbr.rel (%p103) target = $region28
        $region27: #{tpu_custom_call.1} parent=23 // pred_region
          %s106 = sand.u32 %s34, 1
          %s107 = scalar_lea.sflag [#allocation8], %s106
          %s108 = sand.u32 %s34, 1
          %s109 = smul.addr %s108, 64
          %s110 = scalar_lea.vmem [#allocation7], %s109
          %s111 = smul.u32 8, %s20
          %113 = vsyncadd %s107, 0
          %s114 = smul.addr %s19, 8
          %s115 = sadd.s32 %s111, %s114
          %s116 = smul.addr %s115, 8
          %s117 = scalar_lea.hbm %s0, %s116
          %s118 = sshll.u32 %s117, 4
          %s119 = int_to_ptr.hbm [resolvable:$true] %s118
          %s120 = sshll.u32 %s110, 4
          %s121 = int_to_ptr.vmem [resolvable:$true] %s120
          %126 = dma.hbm_to_vmem [thread:$0]  %s119, 1024, %s121, %s107, 128, 128, 8
        $region28: #{tpu_custom_call.1} parent=23 // pred_fallthru
          _
      $region24: #{tpu_custom_call.1} parent=5 // pred_fallthru
        _
      %p127 = scmp.le.s32.totalorder 1, %s13
      // Predicated region
      $region29: #{tpu_custom_call.1} parent=5 // pred_check
        %p128 = pneg %p127
      $region30: #{tpu_custom_call.1} parent=5 // pred_check_branch
        %130 = sbr.rel (%p128) target = $region32
      $region31: #{tpu_custom_call.1} parent=5 // pred_region
        %s131 = ssub.s32 %s13, 1
        %s132 = sand.u32 %s37, 1
        %s133 = scalar_lea.sflag [#allocation8], %s132
        %s134 = sand.u32 %s37, 1
        %s135 = smul.addr %s134, 64
        %s136 = scalar_lea.vmem [#allocation7], %s135
        // Predicated region
        $region33: #{tpu_custom_call.1} parent=31 // pred_check
          %p137 = pneg %p50
        $region34: #{tpu_custom_call.1} parent=31 // pred_check_branch
          %139 = sbr.rel (%p137) target = $region36
        $region35: #{tpu_custom_call.1} parent=31 // pred_region
          %141 = dma.done %s133, 1024
        $region36: #{tpu_custom_call.1} parent=31 // pred_fallthru
          _
        // Predicated region
        $region37: #{tpu_custom_call.1} parent=31 // pred_check
          %p142 = pneg %p64
        $region38: #{tpu_custom_call.1} parent=31 // pred_check_branch
          %144 = sbr.rel (%p142) target = $region40
        $region39: #{tpu_custom_call.1} parent=31 // pred_region
          %146 = dma.done [#allocation10], 16
        $region40: #{tpu_custom_call.1} parent=31 // pred_fallthru
          _
        %s147 = sand.u32 %s37, 1
        %s148 = scalar_lea.sflag [#allocation8], %s147
        %s149 = sand.u32 %s37, 1
        %s150 = smul.addr %s149, 64
        %s151 = scalar_lea.vmem [#allocation7], %s150
        %p152 = pneg %p50
        %p153 = pneg %p46
        %p154 = pneg %p64
        %p155 = pneg %p60
        %p156 = pneg %p78
        %p157 = pneg %p74
        %s158 = smul.u32 8, %s22
        %v159 = vld [vmem:[#allocation9] sm:$0x1]
        %v160 = vld [vmem:[%s2] sm:$0x1]
        %v161 = vld [vmem:[%s136] sm:$0xff]
        %v162 = vld [vmem:[%s136 + $0x8] sm:$0xff]
        %v163 = vld [vmem:[%s136 + $0x10] sm:$0xff]
        %v164 = vld [vmem:[%s136 + $0x18] sm:$0xff]
        %v165 = vld [vmem:[%s136 + $0x20] sm:$0xff]
        %v166 = vld [vmem:[%s136 + $0x28] sm:$0xff]
        %v167 = vld [vmem:[%s136 + $0x30] sm:$0xff]
        %v168 = vld [vmem:[%s136 + $0x38] sm:$0xff]
        %169 = vadd.xlane.f32.xlu0 %v161
        %v170 = vpop.xlane.xlu0 %169
        %171 = vadd.xlane.f32.xlu0 %v162
        %v172 = vpop.xlane.xlu0 %171
        %173 = vadd.xlane.f32.xlu0 %v163
        %v174 = vpop.xlane.xlu0 %173
        %175 = vadd.xlane.f32.xlu0 %v164
        %v176 = vpop.xlane.xlu0 %175
        %177 = vadd.xlane.f32.xlu0 %v165
        %v178 = vpop.xlane.xlu0 %177
        %179 = vadd.xlane.f32.xlu0 %v166
        %v180 = vpop.xlane.xlu0 %179
        %181 = vadd.xlane.f32.xlu0 %v167
        %v182 = vpop.xlane.xlu0 %181
        %183 = vadd.xlane.f32.xlu0 %v168
        %v184 = vpop.xlane.xlu0 %183
        %v185 = vrcp.pop 128.0
        %v186 = vmul.f32 128.0, %v185
        %v187 = vsub.f32 1.0, %v186
        %v188 = vmul.f32 %v185, %v187
        %v189 = vadd.f32 %v185, %v188
        %vm190 = vweird.f32 %v185
        %v191 = vsel %vm190, %v185, %v189
        %v192 = vmul.f32 %v170, %v191
        %v193 = vmul.f32 %v172, %v191
        %v194 = vmul.f32 %v174, %v191
        %v195 = vmul.f32 %v176, %v191
        %v196 = vmul.f32 %v178, %v191
        %v197 = vmul.f32 %v180, %v191
        %v198 = vmul.f32 %v182, %v191
        %v199 = vmul.f32 %v184, %v191
        %v200 = vsub.f32 %v161, %v192
        %v201 = vsub.f32 %v162, %v193
        %v202 = vsub.f32 %v163, %v194
        %v203 = vsub.f32 %v164, %v195
        %v204 = vsub.f32 %v165, %v196
        %v205 = vsub.f32 %v166, %v197
        %v206 = vsub.f32 %v167, %v198
        %v207 = vsub.f32 %v168, %v199
        %v208 = vmul.f32 %v200, %v200
        %v209 = vmul.f32 %v201, %v201
        %v210 = vmul.f32 %v202, %v202
        %v211 = vmul.f32 %v203, %v203
        %v212 = vmul.f32 %v204, %v204
        %v213 = vmul.f32 %v205, %v205
        %v214 = vmul.f32 %v206, %v206
        %v215 = vmul.f32 %v207, %v207
        %216 = vadd.xlane.f32.xlu0 %v208
        %v217 = vpop.xlane.xlu0 %216
        %218 = vadd.xlane.f32.xlu0 %v209
        %v219 = vpop.xlane.xlu0 %218
        %220 = vadd.xlane.f32.xlu0 %v210
        %v221 = vpop.xlane.xlu0 %220
        %222 = vadd.xlane.f32.xlu0 %v211
        %v223 = vpop.xlane.xlu0 %222
        %224 = vadd.xlane.f32.xlu0 %v212
        %v225 = vpop.xlane.xlu0 %224
        %226 = vadd.xlane.f32.xlu0 %v213
        %v227 = vpop.xlane.xlu0 %226
        %228 = vadd.xlane.f32.xlu0 %v214
        %v229 = vpop.xlane.xlu0 %228
        %230 = vadd.xlane.f32.xlu0 %v215
        %v231 = vpop.xlane.xlu0 %230
        %v232 = vmul.f32 %v217, %v191
        %v233 = vmul.f32 %v219, %v191
        %v234 = vmul.f32 %v221, %v191
        %v235 = vmul.f32 %v223, %v191
        %v236 = vmul.f32 %v225, %v191
        %v237 = vmul.f32 %v227, %v191
        %v238 = vmul.f32 %v229, %v191
        %v239 = vmul.f32 %v231, %v191
        %v240 = vadd.f32 %v232, 1e-05
        %v241 = vadd.f32 %v233, 1e-05
        %v242 = vadd.f32 %v234, 1e-05
        %v243 = vadd.f32 %v235, 1e-05
        %v244 = vadd.f32 %v236, 1e-05
        %v245 = vadd.f32 %v237, 1e-05
        %v246 = vadd.f32 %v238, 1e-05
        %v247 = vadd.f32 %v239, 1e-05
        %v248 = vrsqrt.pop %v240
        %v249 = vmul.f32 %v248, %v240
        %v250 = vmul.f32 %v249, %v248
        %v251 = vmul.f32 0.5, %v250
        %v252 = vsub.f32 1.5, %v251
        %v253 = vmul.f32 %v248, %v252
        %vm254 = vweird.f32 %v240
        %vm255 = vweird.f32 %v248
        %vm256 = vmor %vm254, %vm255
        %v257 = vsel %vm256, %v248, %v253
        %v258 = vrsqrt.pop %v241
        %v259 = vmul.f32 %v258, %v241
        %v260 = vmul.f32 %v259, %v258
        %v261 = vmul.f32 0.5, %v260
        %v262 = vsub.f32 1.5, %v261
        %v263 = vmul.f32 %v258, %v262
        %vm264 = vweird.f32 %v241
        %vm265 = vweird.f32 %v258
        %vm266 = vmor %vm264, %vm265
        %v267 = vsel %vm266, %v258, %v263
        %v268 = vrsqrt.pop %v242
        %v269 = vmul.f32 %v268, %v242
        %v270 = vmul.f32 %v269, %v268
        %v271 = vmul.f32 0.5, %v270
        %v272 = vsub.f32 1.5, %v271
        %v273 = vmul.f32 %v268, %v272
        %vm274 = vweird.f32 %v242
        %vm275 = vweird.f32 %v268
        %vm276 = vmor %vm274, %vm275
        %v277 = vsel %vm276, %v268, %v273
        %v278 = vrsqrt.pop %v243
        %v279 = vmul.f32 %v278, %v243
        %v280 = vmul.f32 %v279, %v278
        %v281 = vmul.f32 0.5, %v280
        %v282 = vsub.f32 1.5, %v281
        %v283 = vmul.f32 %v278, %v282
        %vm284 = vweird.f32 %v243
        %vm285 = vweird.f32 %v278
        %vm286 = vmor %vm284, %vm285
        %v287 = vsel %vm286, %v278, %v283
        %v288 = vrsqrt.pop %v244
        %v289 = vmul.f32 %v288, %v244
        %v290 = vmul.f32 %v289, %v288
        %v291 = vmul.f32 0.5, %v290
        %v292 = vsub.f32 1.5, %v291
        %v293 = vmul.f32 %v288, %v292
        %vm294 = vweird.f32 %v244
        %vm295 = vweird.f32 %v288
        %vm296 = vmor %vm294, %vm295
        %v297 = vsel %vm296, %v288, %v293
        %v298 = vrsqrt.pop %v245
        %v299 = vmul.f32 %v298, %v245
        %v300 = vmul.f32 %v299, %v298
        %v301 = vmul.f32 0.5, %v300
        %v302 = vsub.f32 1.5, %v301
        %v303 = vmul.f32 %v298, %v302
        %vm304 = vweird.f32 %v245
        %vm305 = vweird.f32 %v298
        %vm306 = vmor %vm304, %vm305
        %v307 = vsel %vm306, %v298, %v303
        %v308 = vrsqrt.pop %v246
        %v309 = vmul.f32 %v308, %v246
        %v310 = vmul.f32 %v309, %v308
        %v311 = vmul.f32 0.5, %v310
        %v312 = vsub.f32 1.5, %v311
        %v313 = vmul.f32 %v308, %v312
        %vm314 = vweird.f32 %v246
        %vm315 = vweird.f32 %v308
        %vm316 = vmor %vm314, %vm315
        %v317 = vsel %vm316, %v308, %v313
        %v318 = vrsqrt.pop %v247
        %v319 = vmul.f32 %v318, %v247
        %v320 = vmul.f32 %v319, %v318
        %v321 = vmul.f32 0.5, %v320
        %v322 = vsub.f32 1.5, %v321
        %v323 = vmul.f32 %v318, %v322
        %vm324 = vweird.f32 %v247
        %vm325 = vweird.f32 %v318
        %vm326 = vmor %vm324, %vm325
        %v327 = vsel %vm326, %v318, %v323
        %v328 = vmul.f32 %v200, %v257
        %v329 = vmul.f32 %v201, %v267
        %v330 = vmul.f32 %v202, %v277
        %v331 = vmul.f32 %v203, %v287
        %v332 = vmul.f32 %v204, %v297
        %v333 = vmul.f32 %v205, %v307
        %v334 = vmul.f32 %v206, %v317
        %v335 = vmul.f32 %v207, %v327
        %v337 = vperm.slane %v159, 0
        %v339 = vmul.f32 %v328, %v337
        %v340 = vmul.f32 %v329, %v337
        %v341 = vmul.f32 %v330, %v337
        %v342 = vmul.f32 %v331, %v337
        %v343 = vmul.f32 %v332, %v337
        %v344 = vmul.f32 %v333, %v337
        %v345 = vmul.f32 %v334, %v337
        %v346 = vmul.f32 %v335, %v337
        %v348 = vperm.slane %v160, 0
        %v350 = vadd.f32 %v339, %v348
        %v351 = vadd.f32 %v340, %v348
        %v352 = vadd.f32 %v341, %v348
        %v353 = vadd.f32 %v342, %v348
        %v354 = vadd.f32 %v343, %v348
        %v355 = vadd.f32 %v344, %v348
        %v356 = vadd.f32 %v345, %v348
        %v357 = vadd.f32 %v346, %v348
        %358 = vst [vmem:[#allocation2] sm:$0xff] %v350
        %359 = vst [vmem:[#allocation2 + $0x8] sm:$0xff] %v351
        %360 = vst [vmem:[#allocation2 + $0x10] sm:$0xff] %v352
        %361 = vst [vmem:[#allocation2 + $0x18] sm:$0xff] %v353
        %362 = vst [vmem:[#allocation2 + $0x20] sm:$0xff] %v354
        %363 = vst [vmem:[#allocation2 + $0x28] sm:$0xff] %v355
        %364 = vst [vmem:[#allocation2 + $0x30] sm:$0xff] %v356
        %365 = vst [vmem:[#allocation2 + $0x38] sm:$0xff] %v357
        %v366 = vld [vmem:[%s136] ss:$4 sm:$0xff]
        %s367 = scalar_lea.vmem %s136, 32 [#allocation7]
        %v368 = vld [vmem:[%s367] ss:$4 sm:$0xff]
        %s369 = scalar_lea.vmem %s136, 1 [#allocation7]
        %v370 = vld [vmem:[%s369] ss:$4 sm:$0xff]
        %s371 = scalar_lea.vmem %s136, 33 [#allocation7]
        %v372 = vld [vmem:[%s371] ss:$4 sm:$0xff]
        %v373 = vadd.f32 %v366, %v370
        %v374 = vadd.f32 %v368, %v372
        %s375 = scalar_lea.vmem %s136, 2 [#allocation7]
        %v376 = vld [vmem:[%s375] ss:$4 sm:$0xff]
        %s377 = scalar_lea.vmem %s136, 34 [#allocation7]
        %v378 = vld [vmem:[%s377] ss:$4 sm:$0xff]
        %v379 = vadd.f32 %v373, %v376
        %v380 = vadd.f32 %v374, %v378
        %s381 = scalar_lea.vmem %s136, 3 [#allocation7]
        %v382 = vld [vmem:[%s381] ss:$4 sm:$0xff]
        %s383 = scalar_lea.vmem %s136, 35 [#allocation7]
        %v384 = vld [vmem:[%s383] ss:$4 sm:$0xff]
        %v385 = vadd.f32 %v379, %v382
        %v386 = vadd.f32 %v380, %v384
        %v387 = vmul.f32 %v385, 0.25
        %v388 = vmul.f32 %v386, 0.25
        %389 = vadd.xlane.f32.xlu0 %v387
        %v390 = vpop.xlane.xlu0 %389
        %391 = vadd.xlane.f32.xlu0 %v388
        %v392 = vpop.xlane.xlu0 %391
        %v393 = vmul.f32 %v390, %v191
        %v394 = vmul.f32 %v392, %v191
        %v395 = vsub.f32 %v387, %v393
        %v396 = vsub.f32 %v388, %v394
        %v397 = vmul.f32 %v395, %v395
        %v398 = vmul.f32 %v396, %v396
        %399 = vadd.xlane.f32.xlu0 %v397
        %v400 = vpop.xlane.xlu0 %399
        %401 = vadd.xlane.f32.xlu0 %v398
        %v402 = vpop.xlane.xlu0 %401
        %v403 = vmul.f32 %v400, %v191
        %v404 = vmul.f32 %v402, %v191
        %v405 = vadd.f32 %v403, 1e-05
        %v406 = vadd.f32 %v404, 1e-05
        %v407 = vrsqrt.pop %v405
        %v408 = vmul.f32 %v407, %v405
        %v409 = vmul.f32 %v408, %v407
        %v410 = vmul.f32 0.5, %v409
        %v411 = vsub.f32 1.5, %v410
        %v412 = vmul.f32 %v407, %v411
        %vm413 = vweird.f32 %v405
        %vm414 = vweird.f32 %v407
        %vm415 = vmor %vm413, %vm414
        %v416 = vsel %vm415, %v407, %v412
        %v417 = vrsqrt.pop %v406
        %v418 = vmul.f32 %v417, %v406
        %v419 = vmul.f32 %v418, %v417
        %v420 = vmul.f32 0.5, %v419
        %v421 = vsub.f32 1.5, %v420
        %v422 = vmul.f32 %v417, %v421
        %vm423 = vweird.f32 %v406
        %vm424 = vweird.f32 %v417
        %vm425 = vmor %vm423, %vm424
        %v426 = vsel %vm425, %v417, %v422
        %v427 = vmul.f32 %v395, %v416
        %v428 = vmul.f32 %v396, %v426
        %v429 = vmul.f32 %v427, %v337
        %v430 = vmul.f32 %v428, %v337
        %v431 = vadd.f32 %v429, %v348
        %v432 = vadd.f32 %v430, %v348
        %433 = vst [vmem:[#allocation3] sm:$0xff] %v431
        %434 = vst [vmem:[#allocation3 + $0x8] sm:$0xff] %v432
        %v435 = vld [vmem:[%s136] ss:$16 sm:$0x3]
        %v436 = vld [vmem:[%s136] ss:$16 sm:$0xc]
        %v437 = vor.u32 %v435, %v436
        %v438 = vld [vmem:[%s369] ss:$16 sm:$0x3]
        %v439 = vld [vmem:[%s369] ss:$16 sm:$0xc]
        %v440 = vor.u32 %v438, %v439
        %v441 = vadd.f32 %v437, %v440
        %v442 = vld [vmem:[%s375] ss:$16 sm:$0x3]
        %v443 = vld [vmem:[%s375] ss:$16 sm:$0xc]
        %v444 = vor.u32 %v442, %v443
        %v445 = vadd.f32 %v441, %v444
        %v446 = vld [vmem:[%s381] ss:$16 sm:$0x3]
        %v447 = vld [vmem:[%s381] ss:$16 sm:$0xc]
        %v448 = vor.u32 %v446, %v447
        %v449 = vadd.f32 %v445, %v448
        %s450 = scalar_lea.vmem %s136, 4 [#allocation7]
        %v451 = vld [vmem:[%s450] ss:$16 sm:$0x3]
        %v452 = vld [vmem:[%s450] ss:$16 sm:$0xc]
        %v453 = vor.u32 %v451, %v452
        %v454 = vadd.f32 %v449, %v453
        %s455 = scalar_lea.vmem %s136, 5 [#allocation7]
        %v456 = vld [vmem:[%s455] ss:$16 sm:$0x3]
        %v457 = vld [vmem:[%s455] ss:$16 sm:$0xc]
        %v458 = vor.u32 %v456, %v457
        %v459 = vadd.f32 %v454, %v458
        %s460 = scalar_lea.vmem %s136, 6 [#allocation7]
        %v461 = vld [vmem:[%s460] ss:$16 sm:$0x3]
        %v462 = vld [vmem:[%s460] ss:$16 sm:$0xc]
        %v463 = vor.u32 %v461, %v462
        %v464 = vadd.f32 %v459, %v463
        %s465 = scalar_lea.vmem %s136, 7 [#allocation7]
        %v466 = vld [vmem:[%s465] ss:$16 sm:$0x3]
        %v467 = vld [vmem:[%s465] ss:$16 sm:$0xc]
        %v468 = vor.u32 %v466, %v467
        %v469 = vadd.f32 %v464, %v468
        %s470 = scalar_lea.vmem %s136, 8 [#allocation7]
        %v471 = vld [vmem:[%s470] ss:$16 sm:$0x3]
        %v472 = vld [vmem:[%s470] ss:$16 sm:$0xc]
        %v473 = vor.u32 %v471, %v472
        %v474 = vadd.f32 %v469, %v473
        %s475 = scalar_lea.vmem %s136, 9 [#allocation7]
        %v476 = vld [vmem:[%s475] ss:$16 sm:$0x3]
        %v477 = vld [vmem:[%s475] ss:$16 sm:$0xc]
        %v478 = vor.u32 %v476, %v477
        %v479 = vadd.f32 %v474, %v478
        %s480 = scalar_lea.vmem %s136, 10 [#allocation7]
        %v481 = vld [vmem:[%s480] ss:$16 sm:$0x3]
        %v482 = vld [vmem:[%s480] ss:$16 sm:$0xc]
        %v483 = vor.u32 %v481, %v482
        %v484 = vadd.f32 %v479, %v483
        %s485 = scalar_lea.vmem %s136, 11 [#allocation7]
        %v486 = vld [vmem:[%s485] ss:$16 sm:$0x3]
        %v487 = vld [vmem:[%s485] ss:$16 sm:$0xc]
        %v488 = vor.u32 %v486, %v487
        %v489 = vadd.f32 %v484, %v488
        %s490 = scalar_lea.vmem %s136, 12 [#allocation7]
        %v491 = vld [vmem:[%s490] ss:$16 sm:$0x3]
        %v492 = vld [vmem:[%s490] ss:$16 sm:$0xc]
        %v493 = vor.u32 %v491, %v492
        %v494 = vadd.f32 %v489, %v493
        %s495 = scalar_lea.vmem %s136, 13 [#allocation7]
        %v496 = vld [vmem:[%s495] ss:$16 sm:$0x3]
        %v497 = vld [vmem:[%s495] ss:$16 sm:$0xc]
        %v498 = vor.u32 %v496, %v497
        %v499 = vadd.f32 %v494, %v498
        %s500 = scalar_lea.vmem %s136, 14 [#allocation7]
        %v501 = vld [vmem:[%s500] ss:$16 sm:$0x3]
        %v502 = vld [vmem:[%s500] ss:$16 sm:$0xc]
        %v503 = vor.u32 %v501, %v502
        %v504 = vadd.f32 %v499, %v503
        %s505 = scalar_lea.vmem %s136, 15 [#allocation7]
        %v506 = vld [vmem:[%s505] ss:$16 sm:$0x3]
        %v507 = vld [vmem:[%s505] ss:$16 sm:$0xc]
        %v508 = vor.u32 %v506, %v507
        %v509 = vadd.f32 %v504, %v508
        %v510 = vmul.f32 %v509, 0.0625
        %vm511 = vcmask 1043456
        %v512 = vsel %vm511, %v510, 0.0
        %513 = vadd.xlane.f32.xlu0 %v512
        %v514 = vpop.xlane.xlu0 %513
        %v515 = vmul.f32 %v514, %v191
        %v516 = vsub.f32 %v510, %v515
        %v517 = vmul.f32 %v516, %v516
        %v518 = vsel %vm511, %v517, 0.0
        %519 = vadd.xlane.f32.xlu0 %v518
        %v520 = vpop.xlane.xlu0 %519
        %v521 = vmul.f32 %v520, %v191
        %v522 = vadd.f32 %v521, 1e-05
        %v523 = vrsqrt.pop %v522
        %v524 = vmul.f32 %v523, %v522
        %v525 = vmul.f32 %v524, %v523
        %v526 = vmul.f32 0.5, %v525
        %v527 = vsub.f32 1.5, %v526
        %v528 = vmul.f32 %v523, %v527
        %vm529 = vweird.f32 %v522
        %vm530 = vweird.f32 %v523
        %vm531 = vmor %vm529, %vm530
        %v532 = vsel %vm531, %v523, %v528
        %v533 = vmul.f32 %v516, %v532
        %v534 = vmul.f32 %v533, %v337
        %v535 = vadd.f32 %v534, %v348
        %536 = vst [vmem:[#allocation4] sm:$0xf] %v535
        %v537 = vld [vmem:[%s136] ss:$64 sm:$0x1]
        %v538 = vld [vmem:[%s369] ss:$64 sm:$0x1]
        %v539 = vadd.f32 %v537, %v538
        %v540 = vld [vmem:[%s375] ss:$64 sm:$0x1]
        %v541 = vadd.f32 %v539, %v540
        %v542 = vld [vmem:[%s381] ss:$64 sm:$0x1]
        %v543 = vadd.f32 %v541, %v542
        %v544 = vld [vmem:[%s450] ss:$64 sm:$0x1]
        %v545 = vadd.f32 %v543, %v544
        %v546 = vld [vmem:[%s455] ss:$64 sm:$0x1]
        %v547 = vadd.f32 %v545, %v546
        %v548 = vld [vmem:[%s460] ss:$64 sm:$0x1]
        %v549 = vadd.f32 %v547, %v548
        %v550 = vld [vmem:[%s465] ss:$64 sm:$0x1]
        %v551 = vadd.f32 %v549, %v550
        %v552 = vld [vmem:[%s470] ss:$64 sm:$0x1]
        %v553 = vadd.f32 %v551, %v552
        %v554 = vld [vmem:[%s475] ss:$64 sm:$0x1]
        %v555 = vadd.f32 %v553, %v554
        %v556 = vld [vmem:[%s480] ss:$64 sm:$0x1]
        %v557 = vadd.f32 %v555, %v556
        %v558 = vld [vmem:[%s485] ss:$64 sm:$0x1]
        %v559 = vadd.f32 %v557, %v558
        %v560 = vld [vmem:[%s490] ss:$64 sm:$0x1]
        %v561 = vadd.f32 %v559, %v560
        %v562 = vld [vmem:[%s495] ss:$64 sm:$0x1]
        %v563 = vadd.f32 %v561, %v562
        %v564 = vld [vmem:[%s500] ss:$64 sm:$0x1]
        %v565 = vadd.f32 %v563, %v564
        %v566 = vld [vmem:[%s505] ss:$64 sm:$0x1]
        %v567 = vadd.f32 %v565, %v566
        %s568 = scalar_lea.vmem %s136, 16 [#allocation7]
        %v569 = vld [vmem:[%s568] ss:$64 sm:$0x1]
        %v570 = vadd.f32 %v567, %v569
        %s571 = scalar_lea.vmem %s136, 17 [#allocation7]
        %v572 = vld [vmem:[%s571] ss:$64 sm:$0x1]
        %v573 = vadd.f32 %v570, %v572
        %s574 = scalar_lea.vmem %s136, 18 [#allocation7]
        %v575 = vld [vmem:[%s574] ss:$64 sm:$0x1]
        %v576 = vadd.f32 %v573, %v575
        %s577 = scalar_lea.vmem %s136, 19 [#allocation7]
        %v578 = vld [vmem:[%s577] ss:$64 sm:$0x1]
        %v579 = vadd.f32 %v576, %v578
        %s580 = scalar_lea.vmem %s136, 20 [#allocation7]
        %v581 = vld [vmem:[%s580] ss:$64 sm:$0x1]
        %v582 = vadd.f32 %v579, %v581
        %s583 = scalar_lea.vmem %s136, 21 [#allocation7]
        %v584 = vld [vmem:[%s583] ss:$64 sm:$0x1]
        %v585 = vadd.f32 %v582, %v584
        %s586 = scalar_lea.vmem %s136, 22 [#allocation7]
        %v587 = vld [vmem:[%s586] ss:$64 sm:$0x1]
        %v588 = vadd.f32 %v585, %v587
        %s589 = scalar_lea.vmem %s136, 23 [#allocation7]
        %v590 = vld [vmem:[%s589] ss:$64 sm:$0x1]
        %v591 = vadd.f32 %v588, %v590
        %s592 = scalar_lea.vmem %s136, 24 [#allocation7]
        %v593 = vld [vmem:[%s592] ss:$64 sm:$0x1]
        %v594 = vadd.f32 %v591, %v593
        %s595 = scalar_lea.vmem %s136, 25 [#allocation7]
        %v596 = vld [vmem:[%s595] ss:$64 sm:$0x1]
        %v597 = vadd.f32 %v594, %v596
        %s598 = scalar_lea.vmem %s136, 26 [#allocation7]
        %v599 = vld [vmem:[%s598] ss:$64 sm:$0x1]
        %v600 = vadd.f32 %v597, %v599
        %s601 = scalar_lea.vmem %s136, 27 [#allocation7]
        %v602 = vld [vmem:[%s601] ss:$64 sm:$0x1]
        %v603 = vadd.f32 %v600, %v602
        %s604 = scalar_lea.vmem %s136, 28 [#allocation7]
        %v605 = vld [vmem:[%s604] ss:$64 sm:$0x1]
        %v606 = vadd.f32 %v603, %v605
        %s607 = scalar_lea.vmem %s136, 29 [#allocation7]
        %v608 = vld [vmem:[%s607] ss:$64 sm:$0x1]
        %v609 = vadd.f32 %v606, %v608
        %s610 = scalar_lea.vmem %s136, 30 [#allocation7]
        %v611 = vld [vmem:[%s610] ss:$64 sm:$0x1]
        %v612 = vadd.f32 %v609, %v611
        %s613 = scalar_lea.vmem %s136, 31 [#allocation7]
        %v614 = vld [vmem:[%s613] ss:$64 sm:$0x1]
        %v615 = vadd.f32 %v612, %v614
        %s616 = scalar_lea.vmem %s136, 32 [#allocation7]
        %v617 = vld [vmem:[%s616] ss:$64 sm:$0x1]
        %v618 = vadd.f32 %v615, %v617
        %v619 = vld [vmem:[%s371] ss:$64 sm:$0x1]
        %v620 = vadd.f32 %v618, %v619
        %v621 = vld [vmem:[%s377] ss:$64 sm:$0x1]
        %v622 = vadd.f32 %v620, %v621
        %v623 = vld [vmem:[%s383] ss:$64 sm:$0x1]
        %v624 = vadd.f32 %v622, %v623
        %s625 = scalar_lea.vmem %s136, 36 [#allocation7]
        %v626 = vld [vmem:[%s625] ss:$64 sm:$0x1]
        %v627 = vadd.f32 %v624, %v626
        %s628 = scalar_lea.vmem %s136, 37 [#allocation7]
        %v629 = vld [vmem:[%s628] ss:$64 sm:$0x1]
        %v630 = vadd.f32 %v627, %v629
        %s631 = scalar_lea.vmem %s136, 38 [#allocation7]
        %v632 = vld [vmem:[%s631] ss:$64 sm:$0x1]
        %v633 = vadd.f32 %v630, %v632
        %s634 = scalar_lea.vmem %s136, 39 [#allocation7]
        %v635 = vld [vmem:[%s634] ss:$64 sm:$0x1]
        %v636 = vadd.f32 %v633, %v635
        %s637 = scalar_lea.vmem %s136, 40 [#allocation7]
        %v638 = vld [vmem:[%s637] ss:$64 sm:$0x1]
        %v639 = vadd.f32 %v636, %v638
        %s640 = scalar_lea.vmem %s136, 41 [#allocation7]
        %v641 = vld [vmem:[%s640] ss:$64 sm:$0x1]
        %v642 = vadd.f32 %v639, %v641
        %s643 = scalar_lea.vmem %s136, 42 [#allocation7]
        %v644 = vld [vmem:[%s643] ss:$64 sm:$0x1]
        %v645 = vadd.f32 %v642, %v644
        %s646 = scalar_lea.vmem %s136, 43 [#allocation7]
        %v647 = vld [vmem:[%s646] ss:$64 sm:$0x1]
        %v648 = vadd.f32 %v645, %v647
        %s649 = scalar_lea.vmem %s136, 44 [#allocation7]
        %v650 = vld [vmem:[%s649] ss:$64 sm:$0x1]
        %v651 = vadd.f32 %v648, %v650
        %s652 = scalar_lea.vmem %s136, 45 [#allocation7]
        %v653 = vld [vmem:[%s652] ss:$64 sm:$0x1]
        %v654 = vadd.f32 %v651, %v653
        %s655 = scalar_lea.vmem %s136, 46 [#allocation7]
        %v656 = vld [vmem:[%s655] ss:$64 sm:$0x1]
        %v657 = vadd.f32 %v654, %v656
        %s658 = scalar_lea.vmem %s136, 47 [#allocation7]
        %v659 = vld [vmem:[%s658] ss:$64 sm:$0x1]
        %v660 = vadd.f32 %v657, %v659
        %s661 = scalar_lea.vmem %s136, 48 [#allocation7]
        %v662 = vld [vmem:[%s661] ss:$64 sm:$0x1]
        %v663 = vadd.f32 %v660, %v662
        %s664 = scalar_lea.vmem %s136, 49 [#allocation7]
        %v665 = vld [vmem:[%s664] ss:$64 sm:$0x1]
        %v666 = vadd.f32 %v663, %v665
        %s667 = scalar_lea.vmem %s136, 50 [#allocation7]
        %v668 = vld [vmem:[%s667] ss:$64 sm:$0x1]
        %v669 = vadd.f32 %v666, %v668
        %s670 = scalar_lea.vmem %s136, 51 [#allocation7]
        %v671 = vld [vmem:[%s670] ss:$64 sm:$0x1]
        %v672 = vadd.f32 %v669, %v671
        %s673 = scalar_lea.vmem %s136, 52 [#allocation7]
        %v674 = vld [vmem:[%s673] ss:$64 sm:$0x1]
        %v675 = vadd.f32 %v672, %v674
        %s676 = scalar_lea.vmem %s136, 53 [#allocation7]
        %v677 = vld [vmem:[%s676] ss:$64 sm:$0x1]
        %v678 = vadd.f32 %v675, %v677
        %s679 = scalar_lea.vmem %s136, 54 [#allocation7]
        %v680 = vld [vmem:[%s679] ss:$64 sm:$0x1]
        %v681 = vadd.f32 %v678, %v680
        %s682 = scalar_lea.vmem %s136, 55 [#allocation7]
        %v683 = vld [vmem:[%s682] ss:$64 sm:$0x1]
        %v684 = vadd.f32 %v681, %v683
        %s685 = scalar_lea.vmem %s136, 56 [#allocation7]
        %v686 = vld [vmem:[%s685] ss:$64 sm:$0x1]
        %v687 = vadd.f32 %v684, %v686
        %s688 = scalar_lea.vmem %s136, 57 [#allocation7]
        %v689 = vld [vmem:[%s688] ss:$64 sm:$0x1]
        %v690 = vadd.f32 %v687, %v689
        %s691 = scalar_lea.vmem %s136, 58 [#allocation7]
        %v692 = vld [vmem:[%s691] ss:$64 sm:$0x1]
        %v693 = vadd.f32 %v690, %v692
        %s694 = scalar_lea.vmem %s136, 59 [#allocation7]
        %v695 = vld [vmem:[%s694] ss:$64 sm:$0x1]
        %v696 = vadd.f32 %v693, %v695
        %s697 = scalar_lea.vmem %s136, 60 [#allocation7]
        %v698 = vld [vmem:[%s697] ss:$64 sm:$0x1]
        %v699 = vadd.f32 %v696, %v698
        %s700 = scalar_lea.vmem %s136, 61 [#allocation7]
        %v701 = vld [vmem:[%s700] ss:$64 sm:$0x1]
        %v702 = vadd.f32 %v699, %v701
        %s703 = scalar_lea.vmem %s136, 62 [#allocation7]
        %v704 = vld [vmem:[%s703] ss:$64 sm:$0x1]
        %v705 = vadd.f32 %v702, %v704
        %s706 = scalar_lea.vmem %s136, 63 [#allocation7]
        %v707 = vld [vmem:[%s706] ss:$64 sm:$0x1]
        %v708 = vadd.f32 %v705, %v707
        %v709 = vmul.f32 %v708, 0.015625
        %vm710 = vcmask 1040384
        %v711 = vsel %vm710, %v709, 0.0
        %712 = vadd.xlane.f32.xlu0 %v711
        %v713 = vpop.xlane.xlu0 %712
        %v714 = vmul.f32 %v713, %v191
        %v715 = vsub.f32 %v709, %v714
        %v716 = vmul.f32 %v715, %v715
        %v717 = vsel %vm710, %v716, 0.0
        %718 = vadd.xlane.f32.xlu0 %v717
        %v719 = vpop.xlane.xlu0 %718
        %v720 = vmul.f32 %v719, %v191
        %v721 = vadd.f32 %v720, 1e-05
        %v722 = vrsqrt.pop %v721
        %v723 = vmul.f32 %v722, %v721
        %v724 = vmul.f32 %v723, %v722
        %v725 = vmul.f32 0.5, %v724
        %v726 = vsub.f32 1.5, %v725
        %v727 = vmul.f32 %v722, %v726
        %vm728 = vweird.f32 %v721
        %vm729 = vweird.f32 %v722
        %vm730 = vmor %vm728, %vm729
        %v731 = vsel %vm730, %v722, %v727
        %v732 = vmul.f32 %v715, %v731
        %v733 = vmul.f32 %v732, %v159
        %v734 = vadd.f32 %v733, %v160
        %735 = vst [vmem:[#allocation5] sm:$0x1] %v734
        %s736 = smul.u32 %s22, 64
        %s737 = smul.u32 %s21, 88
        %s738 = sadd.s32 %s736, %s737
        %s739 = scalar_lea.vmem %s3, %s738
        // Predicated region
        $region41: #{tpu_custom_call.1} parent=31 // pred_check
          _
        $region42: #{tpu_custom_call.1} parent=31 // pred_check_branch
          %741 = sbr.rel (0) target = $region44
        $region43: #{tpu_custom_call.1} parent=31 // pred_region
          loop: start=0, step=1, limit=1
          $region45: #{tpu_custom_call.1} parent=43 // loop_pre_header
            _
          $region46: #{tpu_custom_call.1} parent=43 // loop_header
            %s743 = sphi 0, %s747
            %p744 = scmp.ge.s32.totalorder %s743, 1
            %s748 = sphi [#allocation2], [#allocation2]
            %s749 = sphi %s739, %s739
          $region47: #{tpu_custom_call.1} parent=43 // loop_header_branch
            %746 = sbr.rel (%p744) target = $region51
          $region48: #{tpu_custom_call.1} parent=43 // loop_body
            %v750 = vld [vmem:[%s748] sm:$0xff]
            %751 = vst [vmem:[%s749] sm:$0xff] %v750
            %v752 = vld [vmem:[%s748 + $0x8] sm:$0xff]
            %753 = vst [vmem:[%s749 + $0x8] sm:$0xff] %v752
            %v754 = vld [vmem:[%s748 + $0x10] sm:$0xff]
            %755 = vst [vmem:[%s749 + $0x10] sm:$0xff] %v754
            %v756 = vld [vmem:[%s748 + $0x18] sm:$0xff]
            %757 = vst [vmem:[%s749 + $0x18] sm:$0xff] %v756
            %v758 = vld [vmem:[%s748 + $0x20] sm:$0xff]
            %759 = vst [vmem:[%s749 + $0x20] sm:$0xff] %v758
            %v760 = vld [vmem:[%s748 + $0x28] sm:$0xff]
            %761 = vst [vmem:[%s749 + $0x28] sm:$0xff] %v760
            %v762 = vld [vmem:[%s748 + $0x30] sm:$0xff]
            %763 = vst [vmem:[%s749 + $0x30] sm:$0xff] %v762
            %v764 = vld [vmem:[%s748 + $0x38] sm:$0xff]
            %765 = vst [vmem:[%s749 + $0x38] sm:$0xff] %v764
          $region49: #{tpu_custom_call.1} parent=43 // loop_footer
            %s747 = sadd.s32 1, %s743
          $region50: #{tpu_custom_call.1} parent=43 // loop_footer_branch
            %742 = sbr.rel target = $region46
          $region51: #{tpu_custom_call.1} parent=43 // loop_exit
            _
        $region44: #{tpu_custom_call.1} parent=31 // pred_fallthru
          _
        // Predicated region
        $region52: #{tpu_custom_call.1} parent=31 // pred_check
          _
        $region53: #{tpu_custom_call.1} parent=31 // pred_check_branch
          %767 = sbr.rel target = $region55
        $region54: #{tpu_custom_call.1} parent=31 // pred_region
          _
        $region55: #{tpu_custom_call.1} parent=31 // pred_fallthru
          _
        // Predicated region
        $region56: #{tpu_custom_call.1} parent=31 // pred_check
          _
        $region57: #{tpu_custom_call.1} parent=31 // pred_check_branch
          %770 = sbr.rel (0) target = $region59
        $region58: #{tpu_custom_call.1} parent=31 // pred_region
          %771 = vsyncadd [#allocation6], 1024
        $region59: #{tpu_custom_call.1} parent=31 // pred_fallthru
          _
        %s772 = smul.u32 %s22, 16
        %s773 = sadd.s32 %s772, 64
        %s774 = sadd.s32 %s773, %s737
        %s775 = scalar_lea.vmem %s3, %s774
        %s776 = scalar_lea.sflag [#allocation6], 1
        // Predicated region
        $region60: #{tpu_custom_call.1} parent=31 // pred_check
          _
        $region61: #{tpu_custom_call.1} parent=31 // pred_check_branch
          %778 = sbr.rel (0) target = $region63
        $region62: #{tpu_custom_call.1} parent=31 // pred_region
          loop: start=0, step=1, limit=1
          $region64: #{tpu_custom_call.1} parent=62 // loop_pre_header
            _
          $region65: #{tpu_custom_call.1} parent=62 // loop_header
            %s780 = sphi 0, %s784
            %p781 = scmp.ge.s32.totalorder %s780, 1
            %s785 = sphi [#allocation3], [#allocation3]
            %s786 = sphi %s775, %s775
          $region66: #{tpu_custom_call.1} parent=62 // loop_header_branch
            %783 = sbr.rel (%p781) target = $region70
          $region67: #{tpu_custom_call.1} parent=62 // loop_body
            %v787 = vld [vmem:[%s785] sm:$0xff]
            %788 = vst [vmem:[%s786] sm:$0xff] %v787
            %v789 = vld [vmem:[%s785 + $0x8] sm:$0xff]
            %790 = vst [vmem:[%s786 + $0x8] sm:$0xff] %v789
          $region68: #{tpu_custom_call.1} parent=62 // loop_footer
            %s784 = sadd.s32 1, %s780
          $region69: #{tpu_custom_call.1} parent=62 // loop_footer_branch
            %779 = sbr.rel target = $region65
          $region70: #{tpu_custom_call.1} parent=62 // loop_exit
            _
        $region63: #{tpu_custom_call.1} parent=31 // pred_fallthru
          _
        // Predicated region
        $region71: #{tpu_custom_call.1} parent=31 // pred_check
          _
        $region72: #{tpu_custom_call.1} parent=31 // pred_check_branch
          %792 = sbr.rel target = $region74
        $region73: #{tpu_custom_call.1} parent=31 // pred_region
          _
        $region74: #{tpu_custom_call.1} parent=31 // pred_fallthru
          _
        // Predicated region
        $region75: #{tpu_custom_call.1} parent=31 // pred_check
          _
        $region76: #{tpu_custom_call.1} parent=31 // pred_check_branch
          %795 = sbr.rel (0) target = $region78
        $region77: #{tpu_custom_call.1} parent=31 // pred_region
          %796 = vsyncadd %s776, 256
        $region78: #{tpu_custom_call.1} parent=31 // pred_fallthru
          _
        %s797 = smul.u32 %s22, 4
        %s798 = sadd.s32 %s797, 80
        %s799 = sadd.s32 %s798, %s737
        %s800 = scalar_lea.vmem %s3, %s799
        %s801 = scalar_lea.sflag [#allocation6], 2
        // Predicated region
        $region79: #{tpu_custom_call.1} parent=31 // pred_check
          _
        $region80: #{tpu_custom_call.1} parent=31 // pred_check_branch
          %803 = sbr.rel target = $region82
        $region81: #{tpu_custom_call.1} parent=31 // pred_region
          // Predicated region
          $region94: #{tpu_custom_call.1} parent=81 // pred_check
            _
          $region95: #{tpu_custom_call.1} parent=81 // pred_check_branch
            %819 = sbr.rel (0) target = $region97
          $region96: #{tpu_custom_call.1} parent=81 // pred_region
            %s821 = ssub.s32 16, 1
            loop: start=0, step=1, limit=1
            $region98: #{tpu_custom_call.1} parent=96 // loop_pre_header
              _
            $region99: #{tpu_custom_call.1} parent=96 // loop_header
              %s823 = sphi 0, %s827
              %p824 = scmp.ge.s32.totalorder %s823, 1
              %s828 = sphi [#allocation4], [#allocation4]
              %s829 = sphi %s800, %s800
            $region100: #{tpu_custom_call.1} parent=96 // loop_header_branch
              %826 = sbr.rel (%p824) target = $region104
            $region101: #{tpu_custom_call.1} parent=96 // loop_body
              %v830 = vld [vmem:[%s828] sm:%s821]
              %831 = vst [vmem:[%s829] sm:%s821] %v830
            $region102: #{tpu_custom_call.1} parent=96 // loop_footer
              %s827 = sadd.s32 1, %s823
            $region103: #{tpu_custom_call.1} parent=96 // loop_footer_branch
              %822 = sbr.rel target = $region99
            $region104: #{tpu_custom_call.1} parent=96 // loop_exit
              _
          $region97: #{tpu_custom_call.1} parent=81 // pred_fallthru
            _
        $region82: #{tpu_custom_call.1} parent=31 // pred_fallthru
          _
        // Predicated region
        $region83: #{tpu_custom_call.1} parent=31 // pred_check
          _
        $region84: #{tpu_custom_call.1} parent=31 // pred_check_branch
          %805 = sbr.rel (0) target = $region86
        $region85: #{tpu_custom_call.1} parent=31 // pred_region
          %s807 = ssub.s32 16, 1
          loop: start=0, step=1, limit=1
          $region87: #{tpu_custom_call.1} parent=85 // loop_pre_header
            _
          $region88: #{tpu_custom_call.1} parent=85 // loop_header
            %s809 = sphi 0, %s813
            %p810 = scmp.ge.s32.totalorder %s809, 1
            %s814 = sphi [#allocation4], [#allocation4]
            %s815 = sphi %s800, %s800
          $region89: #{tpu_custom_call.1} parent=85 // loop_header_branch
            %812 = sbr.rel (%p810) target = $region93
          $region90: #{tpu_custom_call.1} parent=85 // loop_body
            %v816 = vld [vmem:[%s814] sm:%s807]
            %817 = vst [vmem:[%s815] sm:%s807] %v816
          $region91: #{tpu_custom_call.1} parent=85 // loop_footer
            %s813 = sadd.s32 1, %s809
          $region92: #{tpu_custom_call.1} parent=85 // loop_footer_branch
            %808 = sbr.rel target = $region88
          $region93: #{tpu_custom_call.1} parent=85 // loop_exit
            _
        $region86: #{tpu_custom_call.1} parent=31 // pred_fallthru
          _
        // Predicated region
        $region105: #{tpu_custom_call.1} parent=31 // pred_check
          _
        $region106: #{tpu_custom_call.1} parent=31 // pred_check_branch
          %834 = sbr.rel (0) target = $region108
        $region107: #{tpu_custom_call.1} parent=31 // pred_region
          %835 = vsyncadd %s801, 64
        $region108: #{tpu_custom_call.1} parent=31 // pred_fallthru
          _
        %s836 = sadd.s32 %s22, 84
        %s837 = sadd.s32 %s836, %s737
        %s838 = scalar_lea.vmem %s3, %s837
        %s839 = scalar_lea.sflag [#allocation6], 3
        // Predicated region
        $region109: #{tpu_custom_call.1} parent=31 // pred_check
          _
        $region110: #{tpu_custom_call.1} parent=31 // pred_check_branch
          %841 = sbr.rel target = $region112
        $region111: #{tpu_custom_call.1} parent=31 // pred_region
          // Predicated region
          $region124: #{tpu_custom_call.1} parent=111 // pred_check
            _
          $region125: #{tpu_custom_call.1} parent=111 // pred_check_branch
            %857 = sbr.rel (0) target = $region127
          $region126: #{tpu_custom_call.1} parent=111 // pred_region
            %s859 = ssub.s32 2, 1
            loop: start=0, step=1, limit=1
            $region128: #{tpu_custom_call.1} parent=126 // loop_pre_header
              _
            $region129: #{tpu_custom_call.1} parent=126 // loop_header
              %s861 = sphi 0, %s865
              %p862 = scmp.ge.s32.totalorder %s861, 1
              %s866 = sphi [#allocation5], [#allocation5]
              %s867 = sphi %s838, %s838
            $region130: #{tpu_custom_call.1} parent=126 // loop_header_branch
              %864 = sbr.rel (%p862) target = $region134
            $region131: #{tpu_custom_call.1} parent=126 // loop_body
              %v868 = vld [vmem:[%s866] sm:%s859]
              %869 = vst [vmem:[%s867] sm:%s859] %v868
            $region132: #{tpu_custom_call.1} parent=126 // loop_footer
              %s865 = sadd.s32 1, %s861
            $region133: #{tpu_custom_call.1} parent=126 // loop_footer_branch
              %860 = sbr.rel target = $region129
            $region134: #{tpu_custom_call.1} parent=126 // loop_exit
              _
          $region127: #{tpu_custom_call.1} parent=111 // pred_fallthru
            _
        $region112: #{tpu_custom_call.1} parent=31 // pred_fallthru
          _
        // Predicated region
        $region113: #{tpu_custom_call.1} parent=31 // pred_check
          _
        $region114: #{tpu_custom_call.1} parent=31 // pred_check_branch
          %843 = sbr.rel (0) target = $region116
        $region115: #{tpu_custom_call.1} parent=31 // pred_region
          %s845 = ssub.s32 2, 1
          loop: start=0, step=1, limit=1
          $region117: #{tpu_custom_call.1} parent=115 // loop_pre_header
            _
          $region118: #{tpu_custom_call.1} parent=115 // loop_header
            %s847 = sphi 0, %s851
            %p848 = scmp.ge.s32.totalorder %s847, 1
            %s852 = sphi [#allocation5], [#allocation5]
            %s853 = sphi %s838, %s838
          $region119: #{tpu_custom_call.1} parent=115 // loop_header_branch
            %850 = sbr.rel (%p848) target = $region123
          $region120: #{tpu_custom_call.1} parent=115 // loop_body
            %v854 = vld [vmem:[%s852] sm:%s845]
            %855 = vst [vmem:[%s853] sm:%s845] %v854
          $region121: #{tpu_custom_call.1} parent=115 // loop_footer
            %s851 = sadd.s32 1, %s847
          $region122: #{tpu_custom_call.1} parent=115 // loop_footer_branch
            %846 = sbr.rel target = $region118
          $region123: #{tpu_custom_call.1} parent=115 // loop_exit
            _
        $region116: #{tpu_custom_call.1} parent=31 // pred_fallthru
          _
        // Predicated region
        $region135: #{tpu_custom_call.1} parent=31 // pred_check
          _
        $region136: #{tpu_custom_call.1} parent=31 // pred_check_branch
          %872 = sbr.rel (0) target = $region138
        $region137: #{tpu_custom_call.1} parent=31 // pred_region
          %873 = vsyncadd %s839, 16
        $region138: #{tpu_custom_call.1} parent=31 // pred_fallthru
          _
        %s874 = smul.u32 1, 64
        %s875 = smul.u32 %s874, 1
        %s876 = sshll.u32 %s875, 4
        %877 = dma.done [#allocation6], %s876
        %s878 = smul.u32 1, 16
        %s879 = smul.u32 %s878, 1
        %s880 = sshll.u32 %s879, 4
        %881 = dma.done %s776, %s880
        %s882 = smul.u32 1, 4
        %s883 = smul.u32 %s882, 1
        %s884 = sshll.u32 %s883, 4
        %885 = dma.done %s801, %s884
        %s886 = smul.u32 1, 1
        %s887 = smul.u32 %s886, 1
        %s888 = sshll.u32 %s887, 4
        %889 = dma.done %s839, %s888
      $region32: #{tpu_custom_call.1} parent=5 // pred_fallthru
        _
    $region6: #{tpu_custom_call.1} parent=1 // loop_footer
      %s17 = sadd.s32 1, %s13
    $region7: #{tpu_custom_call.1} parent=1 // loop_footer_branch
      %12 = sbr.rel target = $region3
    $region8: #{tpu_custom_call.1} parent=1 // loop_exit
      _
    %890 = vsyncpa [#allocation8], 1
    %s891 = scalar_lea.sflag [#allocation8], 1
    %892 = vsyncpa %s891, 1
    %893 = vsyncpa [#allocation10], 1
  %894 = vsyncmov [#allocation6]
  %s895 = vpop.sfrf %894
  %p896 = scmp.eq.s32.totalorder %s895, 0
  %p897 = pneg %p896
  %899 = shalt.err (%p897)
  %s900 = scalar_lea.sflag [#allocation6], 1
  %901 = vsyncmov %s900
  %s902 = vpop.sfrf %901
  %p903 = scmp.eq.s32.totalorder %s902, 0
  %p904 = pneg %p903
  %906 = shalt.err (%p904)
  %s907 = scalar_lea.sflag [#allocation6], 2
  %908 = vsyncmov %s907
  %s909 = vpop.sfrf %908
  %p910 = scmp.eq.s32.totalorder %s909, 0
  %p911 = pneg %p910
  %913 = shalt.err (%p911)
  %s914 = scalar_lea.sflag [#allocation6], 3
  %915 = vsyncmov %s914
  %s916 = vpop.sfrf %915
  %p917 = scmp.eq.s32.totalorder %s916, 0
  %p918 = pneg %p917
  %920 = shalt.err (%p918)

</llo_original>
